<compile_context>
chip_gen: v7x
topology: tpu7x:2x2x1
jax: 0.10.0
libtpu: 0.0.40
codegen_flags: <defaults>
</compile_context>

<pallas_src>
import jax
import jax.numpy as jnp
import numpy as np
from jax.experimental import pallas as pl
from jax.experimental.pallas import tpu as pltpu

# ------------- configuration (mirrors FrequencyDomainFIRFilter.__init__, small) -------------
FILTER_ORDER = 15          # M  -> mc has M+1 = 16 coefficients per frame
FRAME_PERIOD = 10
FRAME_LENGTH = 32
FFT_LENGTH = 64            # n_fft == fft_length (alpha=0 path does not use n_fft separately)

M1 = FILTER_ORDER + 1
K_BINS = FFT_LENGTH // 2 + 1                  # 33 rfft bins
K_PAD = ((K_BINS + 15) // 16) * 16            # 48, aligned to the bf16 (16,128) packed tile

assert 2 * FRAME_PERIOD < FRAME_LENGTH


def _round_up(a, b):
    return (a + b - 1) // b * b


def _blackman_window(L):
    # diffsptk Window(window='blackman', norm='power'): symmetric blackman, unit power.
    n = np.arange(L)
    w = 0.42 - 0.5 * np.cos(2 * np.pi * n / (L - 1)) + 0.08 * np.cos(4 * np.pi * n / (L - 1))
    return w / np.sqrt(np.sum(w ** 2))


def _build_tables():
    """Fused DFT tables (windows folded in) for the rows-on-lanes layout.

    Tf: (4*Kp, L+M1) block-diagonal forward table (bf16).
        Tf @ [frames ; cep] -> [Xr ; Xi ; Cr ; Ci]  (analysis window folded in).
    Ti: (L, 2*Kp) inverse (irfft truncated to L) table with synthesis window folded in (bf16).
        Ti @ [Yr ; Yi] -> windowed time-domain frames.
    """
    L, N, K, Kp = FRAME_LENGTH, FFT_LENGTH, K_BINS, K_PAD
    win = _blackman_window(L)                                   # (L,) float64

    k = np.arange(K)[:, None]
    n = np.arange(L)[None, :]
    ang = 2.0 * np.pi * k * n / N                               # (K, L)
    Ffr = win[None, :] * np.cos(ang)                            # analysis window folded in
    Ffi = -win[None, :] * np.sin(ang)

    m = np.arange(M1)[None, :]
    angc = 2.0 * np.pi * k * m / N                              # (K, M1)
    Fcr = np.cos(angc)
    Fci = -np.sin(angc)

    Tf = np.zeros((4 * Kp, L + M1), np.float64)
    Tf[0 * Kp:0 * Kp + K, :L] = Ffr
    Tf[1 * Kp:1 * Kp + K, :L] = Ffi
    Tf[2 * Kp:2 * Kp + K, L:] = Fcr
    Tf[3 * Kp:3 * Kp + K, L:] = Fci

    # irfft (hermitian weights), truncated to L, with synthesis window folded in.
    wk = np.where((k == 0) | (k == N // 2), 1.0, 2.0)           # (K, 1)
    icos = wk * np.cos(ang) / N                                 # (K, L)
    isin = -wk * np.sin(ang) / N                                # (K, L)
    Ti = np.zeros((L, 2 * Kp), np.float64)
    Ti[:, 0 * Kp:0 * Kp + K] = (icos * win[None, :]).T
    Ti[:, 1 * Kp:1 * Kp + K] = (isin * win[None, :]).T

    # bf16 operands for the MXU; padded blocks stay exact zeros.
    return jnp.asarray(Tf, jnp.bfloat16), jnp.asarray(Ti, jnp.bfloat16), win


# --------------------------------- Pallas kernel ---------------------------------
def _fdfir_kernel(cat_ref, tf_ref, ti_ref, out_ref, y_ref):
    Kp = K_PAD
    # One fused forward transform: frames (windowed) and cepstra in a single bf16 MXU matmul.
    xc = jnp.dot(tf_ref[...], cat_ref[...],
                 preferred_element_type=jnp.float32)            # (4*Kp, Rt) f32
    Xr = xc[0 * Kp:1 * Kp, :]
    Xi = xc[1 * Kp:2 * Kp, :]
    Cr = xc[2 * Kp:3 * Kp, :]
    Ci = xc[3 * Kp:4 * Kp, :]
    # H = exp(rfft(cepstrum))   (mgc2sp, alpha=0, gamma=0, minimum phase) -- f32 elementwise.
    eC = jnp.exp(Cr)
    Hr = eC * jnp.cos(Ci)
    Hi = eC * jnp.sin(Ci)
    # Y = H * X  (complex multiply, f32) written straight into the bf16 VMEM scratch
    # (no jnp.concatenate temp).  Kp=48 keeps both halves on 16-sublane tile boundaries.
    y_ref[0 * Kp:1 * Kp, :] = (Hr * Xr - Hi * Xi).astype(y_ref.dtype)
    y_ref[1 * Kp:2 * Kp, :] = (Hr * Xi + Hi * Xr).astype(y_ref.dtype)
    # y = synthesis_window * irfft(Y)[:L]   (window folded into Ti), bf16 MXU, f32 out.
    out_ref[...] = jnp.dot(ti_ref[...], y_ref[...],
                           preferred_element_type=jnp.float32)  # (L, Rt)


def _fdfir_lanes(cat, Tf, Ti, row_tile=2048):
    """cat: (L+M1, R) bf16, rows-on-lanes. Returns filtered, windowed frames (L, R) f32."""
    D, R = cat.shape
    L = FRAME_LENGTH

    Rp0 = _round_up(R, 128)                      # lane-dense minimum padding
    Rt = min(row_tile, Rp0)
    # Guarantee >= 2 grid steps so dimension_semantics=('parallel',) can shard the row
    # tiles across both v7x TensorCores (no-op cost on single-TC v5e/v6e).
    if Rp0 <= Rt and Rt > 128:
        Rt = max(128, _round_up(Rt // 2, 128))
    Rp = max(_round_up(Rp0, Rt), 2 * Rt)
    cat = jnp.pad(cat, ((0, 0), (0, Rp - R)))    # zero rows -> zero output, discarded

    flops = 2 * (4 * K_PAD * D + L * 2 * K_PAD) * Rp
    transcendentals = 3 * K_PAD * Rp             # exp, cos, sin per bin per row
    bytes_accessed = D * Rp * 2 + L * Rp * 4 + int(Tf.size) * 2 + int(Ti.size) * 2

    out = pl.pallas_call(
        _fdfir_kernel,
        out_shape=jax.ShapeDtypeStruct((L, Rp), jnp.float32),
        grid_spec=pltpu.PrefetchScalarGridSpec(
            num_scalar_prefetch=0,
            grid=(Rp // Rt,),
            in_specs=[
                pl.BlockSpec((D, Rt), lambda i: (0, i)),                  # frames+cep (bf16)
                # Constant index_map -> Pallas does not re-DMA the tables per step.
                pl.BlockSpec((4 * K_PAD, D), lambda i: (0, 0)),           # fused fwd table
                pl.BlockSpec((L, 2 * K_PAD), lambda i: (0, 0)),           # fused inv table
            ],
            out_specs=pl.BlockSpec((L, Rt), lambda i: (0, i)),
            scratch_shapes=[pltpu.VMEM((2 * K_PAD, Rt), jnp.bfloat16)],   # Y = [Yr ; Yi]
        ),
        compiler_params=pltpu.CompilerParams(
            dimension_semantics=("parallel",),
            vmem_limit_bytes=32 * 1024 * 1024,   # safe on v5e/v6e (128 MiB) and v7x (64 MiB)
        ),
        cost_estimate=pl.CostEstimate(
            flops=flops, transcendentals=transcendentals, bytes_accessed=bytes_accessed),
    )(cat, Tf, Ti)
    return out[:, :R]                            # (L, R)


# ------------------------------ forward pass (wrapper) ------------------------------
def frequency_domain_fir_filter(x, mc):
    """x: (B, N) float32 waveform; mc: (B, T, M+1) mel-cepstrum per frame."""
    B, N = x.shape
    L, fp = FRAME_LENGTH, FRAME_PERIOD
    left, right = L // 2, (L - 1) // 2                           # Frame(center=True) zero pad
    T = (N - 1) // fp + 1
    assert mc.shape == (B, T, M1)

    # Gather frames straight into the lane-dense (L, B*T) layout: only a major-axis
    # transpose (B,L,T)->(L,B,T) is needed, no minor-dim relayout of the packed input.
    xp = jnp.pad(x, ((0, 0), (left, right))).astype(jnp.bfloat16)
    idx_lt = jnp.arange(L)[:, None] + jnp.arange(T)[None, :] * fp          # (L, T)
    frames = jnp.transpose(xp[:, idx_lt], (1, 0, 2)).reshape(L, B * T)     # (L, R) bf16
    cep = jnp.transpose(mc.astype(jnp.bfloat16), (2, 0, 1)).reshape(M1, B * T)
    cat = jnp.concatenate([frames, cep], axis=0)                           # (L+M1, R) bf16

    Tf, Ti, win = _build_tables()
    yf = _fdfir_lanes(cat, Tf, Ti)                                         # (L, R) f32

    # --- WOLA overlap-add: ceil(L/fp) staggered dense slice-adds (no duplicate-index
    # scatter), done in the (hop, sample, B, T) layout so only the small (B, N)-sized
    # result needs a final relayout.
    n_hops = -(-L // fp)                                                   # 4
    S = T + n_hops - 1
    yf = yf.reshape(L, B, T)
    yf = jnp.pad(yf, ((0, n_hops * fp - L), (0, 0), (0, 0)))               # (n_hops*fp, B, T)
    yf = yf.reshape(n_hops, fp, B, T)
    ola = jnp.zeros((fp, B, S), jnp.float32)
    for j in range(n_hops):
        ola = ola.at[:, :, j:j + T].add(yf[j])
    ola = jnp.transpose(ola, (1, 2, 0)).reshape(B, S * fp)                 # (B, >= P)

    # Window-energy normalization (diffsptk Unframe): wsum depends only on static shapes
    # and the window, so it is a trace-time numpy constant (no runtime scatter).
    P = (T - 1) * fp + L
    wsum = np.zeros(P, np.float64)
    for t in range(T):
        wsum[t * fp:t * fp + L] += win ** 2
    wsum = np.where(wsum > 1e-8, wsum, 1.0)
    inv_wsum = jnp.asarray((1.0 / wsum)[left:left + N], jnp.float32)       # (N,)

    return ola[:, left:left + N] * inv_wsum[None, :]


# ------------------------------ pure-JAX reference (jnp.fft) ------------------------------
def _reference(x, mc):
    B, N = x.shape
    L, fp, Nfft = FRAME_LENGTH, FRAME_PERIOD, FFT_LENGTH
    left, right = L // 2, (L - 1) // 2
    xp = jnp.pad(x, ((0, 0), (left, right)))
    T = (N - 1) // fp + 1
    idx = jnp.arange(T)[:, None] * fp + jnp.arange(L)[None, :]
    frames = xp[:, idx]
    win = jnp.asarray(_blackman_window(L), jnp.float32)
    X = jnp.fft.rfft(frames * win, n=Nfft)
    H = jnp.exp(jnp.fft.rfft(mc, n=Nfft))
    Y = H * X
    yf = jnp.fft.irfft(Y, n=Nfft)[..., :L] * win
    P = (T - 1) * fp + L
    flat_idx = idx.reshape(-1)
    ola = jnp.zeros((B, P), jnp.float32).at[:, flat_idx].add(yf.reshape(B, T * L))
    wsum = jnp.zeros((P,), jnp.float32).at[flat_idx].add(jnp.tile(win ** 2, T))
    wsum = jnp.where(wsum > 1e-8, wsum, 1.0)
    return (ola / wsum)[:, left:left + N]


if __name__ == "__main__":
    key = jax.random.PRNGKey(0)
    kx, km = jax.random.split(key)
    B, N = 2, 80
    T = (N - 1) // FRAME_PERIOD + 1                              # 8 frames
    x = jax.random.normal(kx, (B, N), dtype=jnp.float32)
    mc = 0.1 * jax.random.normal(km, (B, T, FILTER_ORDER + 1), dtype=jnp.float32)

    y = jax.jit(frequency_domain_fir_filter)(x, mc)
    y = jax.block_until_ready(y)

    y_ref = _reference(x, mc)
    assert y.shape == x.shape
    assert bool(jnp.all(jnp.isfinite(y)))
    max_err = float(jnp.max(jnp.abs(y - y_ref)))
    scale = max(1.0, float(jnp.max(jnp.abs(y_ref))))
    # bf16 MXU operands (f32 accumulation/elementwise) => validate at bf16-appropriate tolerance.
    assert max_err < 2e-2 * scale, f"max abs error {max_err} (signal scale {scale})"
    print("KERNEL_OK")
</pallas_src>

<mosaic_0001>
module attributes {stable_mosaic.version = 11 : i64} {
  func.func @_fdfir_kernel(%arg0: i32, %arg1: memref<48x128xbf16, #tpu.memory_space<vmem>>, %arg2: memref<192x48xbf16, #tpu.memory_space<vmem>>, %arg3: memref<32x96xbf16, #tpu.memory_space<vmem>>, %arg4: memref<32x128xf32, #tpu.memory_space<vmem>>, %arg5: memref<96x128xbf16, #tpu.memory_space<vmem>>) attributes {dimension_semantics = [#tpu.dimension_semantics<parallel>], iteration_bounds = array<i64: 2>, scalar_prefetch = 0 : i64, scratch_operands = 1 : i64, tpu.core_type = #tpu.core_type<tc>, window_params = [{transform_indices = @transform_0, window_bounds = array<i64: 48, 128>}, {pipeline_mode = #tpu.pipeline_mode<synchronous>, transform_indices = @transform_1, window_bounds = array<i64: 192, 48>}, {pipeline_mode = #tpu.pipeline_mode<synchronous>, transform_indices = @transform_2, window_bounds = array<i64: 32, 96>}, {transform_indices = @transform_3, window_bounds = array<i64: 32, 128>}]} {
    %c0 = arith.constant 0 : index
    %c0_0 = arith.constant 0 : index
    %0 = vector.load %arg2[%c0, %c0_0] : memref<192x48xbf16, #tpu.memory_space<vmem>>, vector<192x48xbf16>
    %c0_1 = arith.constant 0 : index
    %c0_2 = arith.constant 0 : index
    %1 = vector.load %arg1[%c0_1, %c0_2] : memref<48x128xbf16, #tpu.memory_space<vmem>>, vector<48x128xbf16>
    %cst = arith.constant dense<0.000000e+00> : vector<192x128xf32>
    %2 = tpu.matmul %0, %1, %cst {dimension_numbers = #tpu.dot_dimension_numbers<[1], [0], [0], [1], [0, 0, 1, 1], [], []>} : vector<192x48xbf16>, vector<48x128xbf16>, vector<192x128xf32> -> vector<192x128xf32>
    %3 = vector.extract_strided_slice %2 {offsets = [0, 0], sizes = [48, 128], strides = [1, 1]} : vector<192x128xf32> to vector<48x128xf32>
    %4 = vector.extract_strided_slice %2 {offsets = [48, 0], sizes = [48, 128], strides = [1, 1]} : vector<192x128xf32> to vector<48x128xf32>
    %5 = vector.extract_strided_slice %2 {offsets = [96, 0], sizes = [48, 128], strides = [1, 1]} : vector<192x128xf32> to vector<48x128xf32>
    %6 = vector.extract_strided_slice %2 {offsets = [144, 0], sizes = [48, 128], strides = [1, 1]} : vector<192x128xf32> to vector<48x128xf32>
    %7 = math.exp %5 : vector<48x128xf32>
    %8 = math.cos %6 : vector<48x128xf32>
    %9 = arith.mulf %7, %8 : vector<48x128xf32>
    %10 = math.sin %6 : vector<48x128xf32>
    %11 = arith.mulf %7, %10 : vector<48x128xf32>
    %12 = arith.mulf %9, %3 : vector<48x128xf32>
    %13 = arith.mulf %11, %4 : vector<48x128xf32>
    %14 = arith.subf %12, %13 : vector<48x128xf32>
    %15 = arith.truncf %14 : vector<48x128xf32> to vector<48x128xbf16>
    %c0_3 = arith.constant 0 : index
    %c0_4 = arith.constant 0 : index
    %16 = vector.load %arg5[%c0_3, %c0_4] : memref<96x128xbf16, #tpu.memory_space<vmem>>, vector<48x128xbf16>
    tpu.vector_store %arg5[%c0_3, %c0_4], %15 {strides = array<i32>} : memref<96x128xbf16, #tpu.memory_space<vmem>>, vector<48x128xbf16>,
    %17 = arith.mulf %9, %4 : vector<48x128xf32>
    %18 = arith.mulf %11, %3 : vector<48x128xf32>
    %19 = arith.addf %17, %18 : vector<48x128xf32>
    %20 = arith.truncf %19 : vector<48x128xf32> to vector<48x128xbf16>
    %c48 = arith.constant 48 : index
    %c0_5 = arith.constant 0 : index
    %21 = vector.load %arg5[%c48, %c0_5] : memref<96x128xbf16, #tpu.memory_space<vmem>>, vector<48x128xbf16>
    tpu.vector_store %arg5[%c48, %c0_5], %20 {strides = array<i32>} : memref<96x128xbf16, #tpu.memory_space<vmem>>, vector<48x128xbf16>,
    %c0_6 = arith.constant 0 : index
    %c0_7 = arith.constant 0 : index
    %22 = vector.load %arg3[%c0_6, %c0_7] : memref<32x96xbf16, #tpu.memory_space<vmem>>, vector<32x96xbf16>
    %c0_8 = arith.constant 0 : index
    %c0_9 = arith.constant 0 : index
    %23 = vector.load %arg5[%c0_8, %c0_9] : memref<96x128xbf16, #tpu.memory_space<vmem>>, vector<96x128xbf16>
    %cst_10 = arith.constant dense<0.000000e+00> : vector<32x128xf32>
    %24 = tpu.matmul %22, %23, %cst_10 {dimension_numbers = #tpu.dot_dimension_numbers<[1], [0], [0], [1], [0, 0, 1, 1], [], []>} : vector<32x96xbf16>, vector<96x128xbf16>, vector<32x128xf32> -> vector<32x128xf32>
    %c0_11 = arith.constant 0 : index
    %c0_12 = arith.constant 0 : index
    %25 = vector.load %arg4[%c0_11, %c0_12] : memref<32x128xf32, #tpu.memory_space<vmem>>, vector<32x128xf32>
    tpu.vector_store %arg4[%c0_11, %c0_12], %24 {strides = array<i32>} : memref<32x128xf32, #tpu.memory_space<vmem>>, vector<32x128xf32>,
    return
  }
  func.func @transform_0(%arg0: i32) -> (i32, i32) {
    %c0_i32 = arith.constant 0 : i32
    %c0_i32_0 = arith.constant 0 : i32
    return %c0_i32, %arg0 : i32, i32
  }
  func.func @transform_1(%arg0: i32) -> (i32, i32) {
    %c0_i32 = arith.constant 0 : i32
    %c0_i32_0 = arith.constant 0 : i32
    %c0_i32_1 = arith.constant 0 : i32
    return %c0_i32, %c0_i32_0 : i32, i32
  }
  func.func @transform_2(%arg0: i32) -> (i32, i32) {
    %c0_i32 = arith.constant 0 : i32
    %c0_i32_0 = arith.constant 0 : i32
    %c0_i32_1 = arith.constant 0 : i32
    return %c0_i32, %c0_i32_0 : i32, i32
  }
  func.func @transform_3(%arg0: i32) -> (i32, i32) {
    %c0_i32 = arith.constant 0 : i32
    %c0_i32_0 = arith.constant 0 : i32
    return %c0_i32, %arg0 : i32, i32
  }
}

</mosaic_0001>

<llo_original>
// kernel: frequency_domain_fir_filter.1
$region0: #{frequency_domain_fir_filter.1}
  #allocation0 [shape = 'u32[]', space=smem, size = 0x4, offset = 0x4, fixed_abs, tag = 'smem constant byte address 0x4 - core index']
  #allocation1 [shape = 'u32[144,128]{1,0:T(1,128)}', space=vmem, size = 0x12000, scoped, tag = 'internal scratch']
  #allocation2 [shape = 'bf16[96,128]{1,0:T(16,128)(2,1)}', space=vmem, size = 0x6000, scoped, tag = 'scratch operand']
  %s0 = inlined_call_operand.vmem [shape: bf16[48,256], index: 0, kind: input, shape index: {}]
  %s1 = inlined_call_operand.vmem [shape: bf16[192,48], index: 1, kind: input, shape index: {}]
  %s2 = inlined_call_operand.vmem [shape: bf16[32,96], index: 2, kind: input, shape index: {}]
  %s3 = inlined_call_operand.vmem [shape: f32[32,256], index: 3, kind: output, shape index: {}]
  %s4 = sld [smem:[#allocation0]]
  $region120: #{frequency_domain_fir_filter.1} parent=0
    _
  %s6 = ssub.s32 1, %s4
  %s7 = scalar_select 0, %s6, %s4
  $region1: #{frequency_domain_fir_filter.1} parent=0
    #allocation3 [shape = 'u8[24576]{0}', space=vmem, size = 0x6000, scoped, tag = 'input window, operand 0']
    #allocation4 [shape = 'u8[32768]{0}', space=vmem, size = 0x8000, scoped, tag = 'output window, operand 0']
    loop: start=0, step=1, limit=4
    $region2: #{frequency_domain_fir_filter.1} parent=1 // loop_pre_header
      _
    $region3: #{frequency_domain_fir_filter.1} parent=1 // loop_header
      %s9 = sphi 0, %s13
      %p10 = scmp.ge.s32.totalorder %s9, 4
      %s19 = sphi 0, %s21
      %s22 = sphi 0, %s19
      %s23 = sphi 0, %s22
      %s39 = sphi 0, %s23
      %s43 = sphi 0, %s43
      %s45 = sphi 0, %s43
      %s46 = sphi 0, %s45
      %s60 = sphi 0, %s46
      %s64 = sphi 0, %s64
      %s66 = sphi 0, %s64
      %s67 = sphi 0, %s66
      %s81 = sphi 0, %s67
      %s87 = sphi 0, %s89
      %s90 = sphi 0, %s87
      %s91 = sphi 0, %s90
      %s107 = sphi 0, %s91
    $region4: #{frequency_domain_fir_filter.1} parent=1 // loop_header_branch
      %12 = sbr.rel (%p10) target = $region8
    $region5: #{frequency_domain_fir_filter.1} parent=1 // loop_body
      %s14 = ssub.s32 %s9, 1
      %s15 = ssub.s32 %s9, 2
      %s16 = sadd.s32 %s9, 1
      %s17 = ssub.s32 %s9, %s16
      %p18 = scmp.eq.s32.totalorder %s17, 0
      %s20 = sadd.s32 %s19, 1
      %s21 = scalar_select %p18, %s19, %s20
      %p24 = pneg %p18
      %p25 = scmp.eq.s32.totalorder %s9, 1
      %p26 = por %p24, %p25
      %p27 = scmp.ne.s32.totalorder %s19, %s22
      %p28 = scmp.eq.s32.totalorder %s9, 0
      %p29 = por %p27, %p28
      %p30 = scmp.ne.s32.totalorder %s19, %s22
      %p31 = scmp.eq.s32.totalorder %s14, 1
      %p32 = por %p30, %p31
      %p33 = scmp.ne.s32.totalorder %s22, %s23
      %p34 = scmp.eq.s32.totalorder %s14, 0
      %p35 = por %p33, %p34
      %p36 = scmp.ne.s32.totalorder %s22, %s23
      %p37 = scmp.eq.s32.totalorder %s15, 1
      %p38 = por %p36, %p37
      %p40 = scmp.ne.s32.totalorder %s23, %s39
      %p41 = scmp.eq.s32.totalorder %s15, 0
      %p42 = por %p40, %p41
      %s44 = sadd.s32 %s43, 1
      %p47 = scmp.eq.s32.totalorder %s9, 1
      %p48 = scmp.ne.s32.totalorder %s43, %s45
      %p49 = scmp.eq.s32.totalorder %s9, 0
      %p50 = por %p48, %p49
      %p51 = scmp.ne.s32.totalorder %s43, %s45
      %p52 = scmp.eq.s32.totalorder %s14, 1
      %p53 = por %p51, %p52
      %p54 = scmp.ne.s32.totalorder %s45, %s46
      %p55 = scmp.eq.s32.totalorder %s14, 0
      %p56 = por %p54, %p55
      %p57 = scmp.ne.s32.totalorder %s45, %s46
      %p58 = scmp.eq.s32.totalorder %s15, 1
      %p59 = por %p57, %p58
      %p61 = scmp.ne.s32.totalorder %s46, %s60
      %p62 = scmp.eq.s32.totalorder %s15, 0
      %p63 = por %p61, %p62
      %s65 = sadd.s32 %s64, 1
      %p68 = scmp.eq.s32.totalorder %s9, 1
      %p69 = scmp.ne.s32.totalorder %s64, %s66
      %p70 = scmp.eq.s32.totalorder %s9, 0
      %p71 = por %p69, %p70
      %p72 = scmp.ne.s32.totalorder %s64, %s66
      %p73 = scmp.eq.s32.totalorder %s14, 1
      %p74 = por %p72, %p73
      %p75 = scmp.ne.s32.totalorder %s66, %s67
      %p76 = scmp.eq.s32.totalorder %s14, 0
      %p77 = por %p75, %p76
      %p78 = scmp.ne.s32.totalorder %s66, %s67
      %p79 = scmp.eq.s32.totalorder %s15, 1
      %p80 = por %p78, %p79
      %p82 = scmp.ne.s32.totalorder %s67, %s81
      %p83 = scmp.eq.s32.totalorder %s15, 0
      %p84 = por %p82, %p83
      %s85 = ssub.s32 %s9, %s16
      %p86 = scmp.eq.s32.totalorder %s85, 0
      %s88 = sadd.s32 %s87, 1
      %s89 = scalar_select %p86, %s87, %s88
      %p92 = pneg %p86
      %p93 = scmp.eq.s32.totalorder %s9, 1
      %p94 = por %p92, %p93
      %p95 = scmp.ne.s32.totalorder %s87, %s90
      %p96 = scmp.eq.s32.totalorder %s9, 0
      %p97 = por %p95, %p96
      %p98 = scmp.ne.s32.totalorder %s87, %s90
      %p99 = scmp.eq.s32.totalorder %s14, 1
      %p100 = por %p98, %p99
      %p101 = scmp.ne.s32.totalorder %s90, %s91
      %p102 = scmp.eq.s32.totalorder %s14, 0
      %p103 = por %p101, %p102
      %p104 = scmp.ne.s32.totalorder %s90, %s91
      %p105 = scmp.eq.s32.totalorder %s15, 1
      %p106 = por %p104, %p105
      %p108 = scmp.ne.s32.totalorder %s91, %s107
      %p109 = scmp.eq.s32.totalorder %s15, 0
      %p110 = por %p108, %p109
      %p111 = scmp.le.s32.totalorder 1, %s9
      %p112 = scmp.lt.s32.totalorder %s9, 3
      %p113 = pnand %p111, %p112
      %p114 = pneg %p113
      // Predicated region
      $region9: #{frequency_domain_fir_filter.1} parent=5 // pred_check
        _
      $region10: #{frequency_domain_fir_filter.1} parent=5 // pred_check_branch
        %116 = sbr.rel (%p113) target = $region12
      $region11: #{frequency_domain_fir_filter.1} parent=5 // pred_region
        %s117 = ssub.s32 %s9, 1
        // Predicated region
        $region13: #{frequency_domain_fir_filter.1} parent=11 // pred_check
          %p118 = pneg %p56
        $region14: #{frequency_domain_fir_filter.1} parent=11 // pred_check_branch
          %120 = sbr.rel (%p118) target = $region16
        $region15: #{frequency_domain_fir_filter.1} parent=11 // pred_region
          _
        $region16: #{frequency_domain_fir_filter.1} parent=11 // pred_fallthru
          _
        // Predicated region
        $region17: #{frequency_domain_fir_filter.1} parent=11 // pred_check
          %p121 = pneg %p77
        $region18: #{frequency_domain_fir_filter.1} parent=11 // pred_check_branch
          %123 = sbr.rel (%p121) target = $region20
        $region19: #{frequency_domain_fir_filter.1} parent=11 // pred_region
          _
        $region20: #{frequency_domain_fir_filter.1} parent=11 // pred_fallthru
          _
      $region12: #{frequency_domain_fir_filter.1} parent=5 // pred_fallthru
        _
      %p124 = scmp.lt.s32.totalorder %s9, 2
      // Predicated region
      $region21: #{frequency_domain_fir_filter.1} parent=5 // pred_check
        %p125 = pneg %p124
      $region22: #{frequency_domain_fir_filter.1} parent=5 // pred_check_branch
        %127 = sbr.rel (%p125) target = $region24
      $region23: #{frequency_domain_fir_filter.1} parent=5 // pred_region
        // Predicated region
        $region25: #{frequency_domain_fir_filter.1} parent=23 // pred_check
          %p128 = pneg %p29
        $region26: #{frequency_domain_fir_filter.1} parent=23 // pred_check_branch
          %130 = sbr.rel (%p128) target = $region28
        $region27: #{frequency_domain_fir_filter.1} parent=23 // pred_region
          %s131 = sand.u32 %s19, 1
          %s132 = sand.u32 %s19, 1
          %s133 = smul.addr %s132, 24
          %s134 = scalar_lea.vmem [#allocation3], %s133
          %s135 = smul.addr %s9, 4
          %s136 = scalar_lea.vmem %s0, %s135
          // Predicated region
          $region29: #{frequency_domain_fir_filter.1} parent=27 // pred_check
            _
          $region30: #{frequency_domain_fir_filter.1} parent=27 // pred_check_branch
            %138 = sbr.rel (0) target = $region32
          $region31: #{frequency_domain_fir_filter.1} parent=27 // pred_region
            // Predicated region
            $region33: #{frequency_domain_fir_filter.1} parent=31 // pred_check
              _
            $region34: #{frequency_domain_fir_filter.1} parent=31 // pred_check_branch
              %140 = sbr.rel target = $region36
            $region35: #{frequency_domain_fir_filter.1} parent=31 // pred_region
              // Predicated region
              $region48: #{frequency_domain_fir_filter.1} parent=35 // pred_check
                _
              $region49: #{frequency_domain_fir_filter.1} parent=35 // pred_check_branch
                %165 = sbr.rel (0) target = $region51
              $region50: #{frequency_domain_fir_filter.1} parent=35 // pred_region
                loop: start=0, step=1, limit=1
                $region52: #{frequency_domain_fir_filter.1} parent=50 // loop_pre_header
                  _
                $region53: #{frequency_domain_fir_filter.1} parent=50 // loop_header
                  %s167 = sphi 0, %s171
                  %p168 = scmp.ge.s32.totalorder %s167, 1
                  %s172 = sphi %s136, %s136
                  %s173 = sphi %s134, %s134
                $region54: #{frequency_domain_fir_filter.1} parent=50 // loop_header_branch
                  %170 = sbr.rel (%p168) target = $region58
                $region55: #{frequency_domain_fir_filter.1} parent=50 // loop_body
                  _
                $region56: #{frequency_domain_fir_filter.1} parent=50 // loop_footer
                  %s171 = sadd.s32 1, %s167
                $region57: #{frequency_domain_fir_filter.1} parent=50 // loop_footer_branch
                  %166 = sbr.rel target = $region53
                $region58: #{frequency_domain_fir_filter.1} parent=50 // loop_exit
                  _
                loop: start=0, step=1, limit=1
                $region59: #{frequency_domain_fir_filter.1} parent=50 // loop_pre_header
                  _
                $region60: #{frequency_domain_fir_filter.1} parent=50 // loop_header
                  %s176 = sphi 0, %s180
                  %p177 = scmp.ge.s32.totalorder %s176, 1
                  %s181 = sphi %s136, %s136
                  %s182 = sphi %s134, %s134
                $region61: #{frequency_domain_fir_filter.1} parent=50 // loop_header_branch
                  %179 = sbr.rel (%p177) target = $region65
                $region62: #{frequency_domain_fir_filter.1} parent=50 // loop_body
                  %v183 = vld [vmem:[%s181] sm:$0xf]
                  %184 = vst [vmem:[%s182] sm:$0xf] %v183
                  %v185 = vld [vmem:[%s181 + $0x8] sm:$0xf]
                  %186 = vst [vmem:[%s182 + $0x4] sm:$0xf] %v185
                  %v187 = vld [vmem:[%s181 + $0x10] sm:$0xf]
                  %188 = vst [vmem:[%s182 + $0x8] sm:$0xf] %v187
                  %v189 = vld [vmem:[%s181 + $0x18] sm:$0xf]
                  %190 = vst [vmem:[%s182 + $0xc] sm:$0xf] %v189
                  %v191 = vld [vmem:[%s181 + $0x20] sm:$0xf]
                  %192 = vst [vmem:[%s182 + $0x10] sm:$0xf] %v191
                  %v193 = vld [vmem:[%s181 + $0x28] sm:$0xf]
                  %194 = vst [vmem:[%s182 + $0x14] sm:$0xf] %v193
                $region63: #{frequency_domain_fir_filter.1} parent=50 // loop_footer
                  %s180 = sadd.s32 1, %s176
                $region64: #{frequency_domain_fir_filter.1} parent=50 // loop_footer_branch
                  %175 = sbr.rel target = $region60
                $region65: #{frequency_domain_fir_filter.1} parent=50 // loop_exit
                  _
              $region51: #{frequency_domain_fir_filter.1} parent=35 // pred_fallthru
                _
            $region36: #{frequency_domain_fir_filter.1} parent=31 // pred_fallthru
              _
            // Predicated region
            $region37: #{frequency_domain_fir_filter.1} parent=31 // pred_check
              _
            $region38: #{frequency_domain_fir_filter.1} parent=31 // pred_check_branch
              %142 = sbr.rel (0) target = $region40
            $region39: #{frequency_domain_fir_filter.1} parent=31 // pred_region
              loop: start=0, step=1, limit=1
              $region41: #{frequency_domain_fir_filter.1} parent=39 // loop_pre_header
                _
              $region42: #{frequency_domain_fir_filter.1} parent=39 // loop_header
                %s145 = sphi 0, %s149
                %p146 = scmp.ge.s32.totalorder %s145, 1
                %s150 = sphi %s136, %s136
                %s151 = sphi %s134, %s134
              $region43: #{frequency_domain_fir_filter.1} parent=39 // loop_header_branch
                %148 = sbr.rel (%p146) target = $region47
              $region44: #{frequency_domain_fir_filter.1} parent=39 // loop_body
                %v152 = vld [vmem:[%s150] sm:$0xf]
                %153 = vst [vmem:[%s151] sm:$0xf] %v152
                %v154 = vld [vmem:[%s150 + $0x8] sm:$0xf]
                %155 = vst [vmem:[%s151 + $0x4] sm:$0xf] %v154
                %v156 = vld [vmem:[%s150 + $0x10] sm:$0xf]
                %157 = vst [vmem:[%s151 + $0x8] sm:$0xf] %v156
                %v158 = vld [vmem:[%s150 + $0x18] sm:$0xf]
                %159 = vst [vmem:[%s151 + $0xc] sm:$0xf] %v158
                %v160 = vld [vmem:[%s150 + $0x20] sm:$0xf]
                %161 = vst [vmem:[%s151 + $0x10] sm:$0xf] %v160
                %v162 = vld [vmem:[%s150 + $0x28] sm:$0xf]
                %163 = vst [vmem:[%s151 + $0x14] sm:$0xf] %v162
              $region45: #{frequency_domain_fir_filter.1} parent=39 // loop_footer
                %s149 = sadd.s32 1, %s145
              $region46: #{frequency_domain_fir_filter.1} parent=39 // loop_footer_branch
                %144 = sbr.rel target = $region42
              $region47: #{frequency_domain_fir_filter.1} parent=39 // loop_exit
                _
            $region40: #{frequency_domain_fir_filter.1} parent=31 // pred_fallthru
              _
          $region32: #{frequency_domain_fir_filter.1} parent=27 // pred_fallthru
            _
          %195 = vnop
        $region28: #{frequency_domain_fir_filter.1} parent=23 // pred_fallthru
          _
      $region24: #{frequency_domain_fir_filter.1} parent=5 // pred_fallthru
        _
      %p196 = scmp.le.s32.totalorder 1, %s9
      %p197 = scmp.lt.s32.totalorder %s9, 3
      %p198 = pnand %p196, %p197
      %p199 = pneg %p198
      // Predicated region
      $region66: #{frequency_domain_fir_filter.1} parent=5 // pred_check
        _
      $region67: #{frequency_domain_fir_filter.1} parent=5 // pred_check_branch
        %201 = sbr.rel (%p198) target = $region69
      $region68: #{frequency_domain_fir_filter.1} parent=5 // pred_region
        %s202 = ssub.s32 %s9, 1
        %s203 = sand.u32 %s22, 1
        %s204 = sand.u32 %s22, 1
        %s205 = smul.addr %s204, 24
        %s206 = scalar_lea.vmem [#allocation3], %s205
        // Predicated region
        $region70: #{frequency_domain_fir_filter.1} parent=68 // pred_check
          %p207 = pneg %p35
        $region71: #{frequency_domain_fir_filter.1} parent=68 // pred_check_branch
          %209 = sbr.rel (%p207) target = $region73
        $region72: #{frequency_domain_fir_filter.1} parent=68 // pred_region
          _
        $region73: #{frequency_domain_fir_filter.1} parent=68 // pred_fallthru
          _
        %s210 = sand.u32 %s22, 1
        %s211 = sand.u32 %s22, 1
        %s212 = smul.addr %s211, 24
        %s213 = scalar_lea.vmem [#allocation3], %s212
        %p214 = pneg %p35
        %p215 = pneg %p32
        %p216 = pneg %p56
        %p217 = pneg %p53
        %p218 = pneg %p77
        %p219 = pneg %p74
        %p220 = pneg %p103
        %p221 = pneg %p100
        %s222 = sand.u32 %s90, 1
        %s223 = sand.u32 %s90, 1
        %s224 = smul.addr %s223, 32
        %s225 = scalar_lea.vmem [#allocation4], %s224
        %v227 = vld [vmem:[%s1] sm:$0xf]
        %v228 = vld [vmem:[%s1 + $0x4] sm:$0xf]
        %v229 = vld [vmem:[%s1 + $0x8] sm:$0xf]
        %v230 = vld [vmem:[%s1 + $0xc] sm:$0xf]
        %v231 = vld [vmem:[%s1 + $0x10] sm:$0xf]
        %v232 = vld [vmem:[%s1 + $0x14] sm:$0xf]
        %v233 = vld [vmem:[%s1 + $0x18] sm:$0xf]
        %v234 = vld [vmem:[%s1 + $0x1c] sm:$0xf]
        %v235 = vld [vmem:[%s1 + $0x20] sm:$0xf]
        %v236 = vld [vmem:[%s1 + $0x24] sm:$0xf]
        %v237 = vld [vmem:[%s1 + $0x28] sm:$0xf]
        %v238 = vld [vmem:[%s1 + $0x2c] sm:$0xf]
        %v239 = vld [vmem:[%s1 + $0x30] sm:$0xf]
        %v240 = vld [vmem:[%s1 + $0x34] sm:$0xf]
        %v241 = vld [vmem:[%s1 + $0x38] sm:$0xf]
        %v242 = vld [vmem:[%s1 + $0x3c] sm:$0xf]
        %v243 = vld [vmem:[%s1 + $0x40] sm:$0xf]
        %v244 = vld [vmem:[%s1 + $0x44] sm:$0xf]
        %v245 = vld [vmem:[%s1 + $0x48] sm:$0xf]
        %v246 = vld [vmem:[%s1 + $0x4c] sm:$0xf]
        %v247 = vld [vmem:[%s1 + $0x50] sm:$0xf]
        %v248 = vld [vmem:[%s1 + $0x54] sm:$0xf]
        %v249 = vld [vmem:[%s1 + $0x58] sm:$0xf]
        %v250 = vld [vmem:[%s1 + $0x5c] sm:$0xf]
        %v251 = vld [vmem:[%s206] sm:$0xf]
        %v252 = vld [vmem:[%s206 + $0x4] sm:$0xf]
        %v253 = vld [vmem:[%s206 + $0x8] sm:$0xf]
        %v254 = vld [vmem:[%s206 + $0xc] sm:$0xf]
        %v255 = vld [vmem:[%s206 + $0x10] sm:$0xf]
        %v256 = vld [vmem:[%s206 + $0x14] sm:$0xf]
        %v281 = vunpack.c.l.b16 %v227
        %v282 = vunpack.c.l.b16 %v228
        %v283 = vunpack.c.l.b16 %v229
        %v284 = vunpack.c.l.b16 %v230
        %v285 = vunpack.c.l.b16 %v231
        %v286 = vunpack.c.l.b16 %v232
        %v287 = vunpack.c.l.b16 %v233
        %v288 = vunpack.c.l.b16 %v234
        %v289 = vunpack.c.l.b16 %v235
        %v290 = vunpack.c.l.b16 %v236
        %v291 = vunpack.c.l.b16 %v237
        %v292 = vunpack.c.l.b16 %v238
        %v293 = vunpack.c.l.b16 %v239
        %v294 = vunpack.c.l.b16 %v240
        %v295 = vunpack.c.l.b16 %v241
        %v296 = vunpack.c.l.b16 %v242
        %v297 = vunpack.c.l.b16 %v243
        %v298 = vunpack.c.l.b16 %v244
        %v299 = vunpack.c.l.b16 %v245
        %v300 = vunpack.c.l.b16 %v246
        %v301 = vunpack.c.l.b16 %v247
        %v302 = vunpack.c.l.b16 %v248
        %v303 = vunpack.c.l.b16 %v249
        %v304 = vunpack.c.l.b16 %v250
        %v305 = vpack.c.b16 %v282, %v281
        %v306 = vpack.c.b16 %v284, %v283
        %v307 = vpack.c.b16 %v286, %v285
        %v308 = vpack.c.b16 %v288, %v287
        %v309 = vpack.c.b16 %v290, %v289
        %v310 = vpack.c.b16 %v292, %v291
        %v311 = vpack.c.b16 %v294, %v293
        %v312 = vpack.c.b16 %v296, %v295
        %v313 = vpack.c.b16 %v298, %v297
        %v314 = vpack.c.b16 %v300, %v299
        %v315 = vpack.c.b16 %v302, %v301
        %v316 = vpack.c.b16 %v304, %v303
        %v323 = vunpack.c.l.b16 %v251
        %v324 = vunpack.c.l.b16 %v252
        %v325 = vunpack.c.l.b16 %v253
        %v326 = vunpack.c.l.b16 %v254
        %v327 = vunpack.c.l.b16 %v255
        %v328 = vunpack.c.l.b16 %v256
        %v329 = vpack.c.b16 %v324, %v323
        %v330 = vpack.c.b16 %v326, %v325
        %v331 = vpack.c.b16 %v328, %v327
        %vm335 = vcmask 392192
        %v337 = vsel %vm335, %v305, 0
        %v340 = vsel %vm335, %v306, 0
        %v343 = vsel %vm335, %v307, 0
        %v346 = vsel %vm335, %v308, 0
        %v349 = vsel %vm335, %v309, 0
        %v352 = vsel %vm335, %v310, 0
        %v355 = vsel %vm335, %v311, 0
        %v358 = vsel %vm335, %v312, 0
        %v361 = vsel %vm335, %v313, 0
        %v364 = vsel %vm335, %v314, 0
        %v367 = vsel %vm335, %v315, 0
        %v370 = vsel %vm335, %v316, 0
        %372 = vmatprep.subr.bf16.mxu0 0
        %373 = vmatpush1.bf16.msra.mxu0 %v329
        %374 = vmatprep.subr.bf16.mxu0 0
        %375 = vmatpush1.bf16.msra.mxu0 %v330
        %376 = vmatprep.subr.bf16.mxu0 0
        %377 = vmatpush1.bf16.msra.mxu0 %v331
        %378 = vmatprep.subr.bf16.mxu0 0
        %379 = vmatpush1.bf16.msra.mxu0 0
        %380 = vmatprep.subr.bf16.mxu0 0
        %381 = vmatpush1.bf16.msra.mxu0 0
        %382 = vmatprep.subr.bf16.mxu0 0
        %383 = vmatpush1.bf16.msra.mxu0 0
        %384 = vmatprep.subr.bf16.mxu0 0
        %385 = vmatpush1.bf16.msra.mxu0 0
        %386 = vmatprep.subr.bf16.mxu0 0
        %387 = vmatpush1.bf16.msra.mxu0 0
        %388 = vmatprep.subr.bf16.mxu0 0
        %389 = vmatpush1.bf16.msra.mxu0 0
        %390 = vmatprep.subr.bf16.mxu0 0
        %391 = vmatpush1.bf16.msra.mxu0 0
        %392 = vmatprep.subr.bf16.mxu0 0
        %393 = vmatpush1.bf16.msra.mxu0 0
        %394 = vmatprep.subr.bf16.mxu0 0
        %395 = vmatpush1.bf16.msra.mxu0 0
        %396 = vmatprep.subr.bf16.mxu0 0
        %397 = vmatpush1.bf16.msra.mxu0 0
        %398 = vmatprep.subr.bf16.mxu0 0
        %399 = vmatpush1.bf16.msra.mxu0 0
        %400 = vmatprep.subr.bf16.mxu0 0
        %401 = vmatpush1.bf16.msra.mxu0 0
        %402 = vmatprep.subr.bf16.mxu0 0
        %403 = vmatpush1.bf16.msra.mxu0 0
        %404 = vmatprep.mubr.bf16.mxu0 0
        %405 = vmatmul.mubr.bf16.gmra.mrb[0].mxu0 %v337
        %v406 = vpop.f32.mrb[0].mxu0
        %v407 = vadd.f32 0.0, %v406
        %v408 = vpop.f32.mrb[0].mxu0
        %v409 = vpop.f32.mrb[0].mxu0
        %v410 = vadd.f32 0.0, %v409
        %v411 = vpop.f32.mrb[0].mxu0
        %412 = vmatprep.mubr.bf16.mxu0 0
        %413 = vmatmul.mubr.bf16.gmra.mrb[0].mxu0 %v340
        %v414 = vpop.f32.mrb[0].mxu0
        %v415 = vadd.f32 0.0, %v414
        %v416 = vpop.f32.mrb[0].mxu0
        %v417 = vpop.f32.mrb[0].mxu0
        %v418 = vadd.f32 0.0, %v417
        %v419 = vpop.f32.mrb[0].mxu0
        %420 = vmatprep.mubr.bf16.mxu0 0
        %421 = vmatmul.mubr.bf16.gmra.mrb[0].mxu0 %v343
        %v422 = vpop.f32.mrb[0].mxu0
        %v423 = vadd.f32 0.0, %v422
        %v424 = vpop.f32.mrb[0].mxu0
        %v425 = vpop.f32.mrb[0].mxu0
        %v426 = vadd.f32 0.0, %v425
        %v427 = vpop.f32.mrb[0].mxu0
        %428 = vmatprep.mubr.bf16.mxu0 0
        %429 = vmatmul.mubr.bf16.gmra.mrb[0].mxu0 %v346
        %v430 = vpop.f32.mrb[0].mxu0
        %v431 = vadd.f32 0.0, %v430
        %v432 = vpop.f32.mrb[0].mxu0
        %v433 = vpop.f32.mrb[0].mxu0
        %v434 = vadd.f32 0.0, %v433
        %v435 = vpop.f32.mrb[0].mxu0
        %436 = vmatprep.mubr.bf16.mxu0 0
        %437 = vmatmul.mubr.bf16.gmra.mrb[0].mxu0 %v349
        %v438 = vpop.f32.mrb[0].mxu0
        %v439 = vadd.f32 0.0, %v438
        %v440 = vpop.f32.mrb[0].mxu0
        %v441 = vpop.f32.mrb[0].mxu0
        %v442 = vadd.f32 0.0, %v441
        %v443 = vpop.f32.mrb[0].mxu0
        %444 = vmatprep.mubr.bf16.mxu0 0
        %445 = vmatmul.mubr.bf16.gmra.mrb[0].mxu0 %v352
        %v446 = vpop.f32.mrb[0].mxu0
        %v447 = vadd.f32 0.0, %v446
        %v448 = vpop.f32.mrb[0].mxu0
        %v449 = vpop.f32.mrb[0].mxu0
        %v450 = vadd.f32 0.0, %v449
        %v451 = vpop.f32.mrb[0].mxu0
        %452 = vmatprep.mubr.bf16.mxu0 0
        %453 = vmatmul.mubr.bf16.gmra.mrb[0].mxu0 %v355
        %v454 = vpop.f32.mrb[0].mxu0
        %v455 = vadd.f32 0.0, %v454
        %v456 = vpop.f32.mrb[0].mxu0
        %v457 = vpop.f32.mrb[0].mxu0
        %v458 = vadd.f32 0.0, %v457
        %v459 = vpop.f32.mrb[0].mxu0
        %460 = vmatprep.mubr.bf16.mxu0 0
        %461 = vmatmul.mubr.bf16.gmra.mrb[0].mxu0 %v358
        %v462 = vpop.f32.mrb[0].mxu0
        %v463 = vadd.f32 0.0, %v462
        %v464 = vpop.f32.mrb[0].mxu0
        %v465 = vpop.f32.mrb[0].mxu0
        %v466 = vadd.f32 0.0, %v465
        %v467 = vpop.f32.mrb[0].mxu0
        %468 = vmatprep.mubr.bf16.mxu0 0
        %469 = vmatmul.mubr.bf16.gmra.mrb[0].mxu0 %v361
        %v470 = vpop.f32.mrb[0].mxu0
        %v471 = vadd.f32 0.0, %v470
        %v472 = vpop.f32.mrb[0].mxu0
        %v473 = vpop.f32.mrb[0].mxu0
        %v474 = vadd.f32 0.0, %v473
        %v475 = vpop.f32.mrb[0].mxu0
        %476 = vmatprep.mubr.bf16.mxu0 0
        %477 = vmatmul.mubr.bf16.gmra.mrb[0].mxu0 %v364
        %v478 = vpop.f32.mrb[0].mxu0
        %v479 = vadd.f32 0.0, %v478
        %v480 = vpop.f32.mrb[0].mxu0
        %v481 = vpop.f32.mrb[0].mxu0
        %v482 = vadd.f32 0.0, %v481
        %v483 = vpop.f32.mrb[0].mxu0
        %484 = vmatprep.mubr.bf16.mxu0 0
        %485 = vmatmul.mubr.bf16.gmra.mrb[0].mxu0 %v367
        %v486 = vpop.f32.mrb[0].mxu0
        %v487 = vadd.f32 0.0, %v486
        %v488 = vpop.f32.mrb[0].mxu0
        %v489 = vpop.f32.mrb[0].mxu0
        %v490 = vadd.f32 0.0, %v489
        %v491 = vpop.f32.mrb[0].mxu0
        %492 = vmatprep.mubr.bf16.mxu0 0
        %493 = vmatmul.mubr.bf16.gmra.mrb[0].mxu0 %v370
        %v494 = vpop.f32.mrb[0].mxu0
        %v495 = vadd.f32 0.0, %v494
        %v496 = vpop.f32.mrb[0].mxu0
        %v497 = vpop.f32.mrb[0].mxu0
        %v498 = vadd.f32 0.0, %v497
        %v499 = vpop.f32.mrb[0].mxu0
        %500 = vdwg.mxu0
        %v501 = vmul.f32 %v455, 1.442695
        %v502 = vpow.pop %v501
        %v503 = vmul.f32 %v458, 1.442695
        %v504 = vpow.pop %v503
        %v505 = vmul.f32 %v463, 1.442695
        %v506 = vpow.pop %v505
        %v507 = vmul.f32 %v466, 1.442695
        %v508 = vpow.pop %v507
        %v509 = vmul.f32 %v471, 1.442695
        %v510 = vpow.pop %v509
        %v511 = vmul.f32 %v474, 1.442695
        %v512 = vpow.pop %v511
        %v513 = vand.u32 2147483647, %v479
        %vm514 = vcmp.le.f32.partialorder %v513, 0.7853982
        %vm515 = vcmp.lt.s32.totalorder %v479, 0
        %v516 = vand.u32 %v479, 2139095040
        %v517 = vshrl.u32 %v516, 23
        %v518 = vsub.s32 %v517, 127
        %v519 = vand.u32 2147483647, %v479
        %v520 = vand.u32 %v519, 8388607
        %v521 = vor.u32 %v520, 8388608
        %v522 = vsub.s32 0, %v521
        %v523 = vadd.s32 %v518, 1
        %vm524 = vcmp.gt.s32.totalorder %v523, 0
        %v525 = vsel %vm524, %v523, 0
        %v526 = vshrl.u32 %v525, 5
        %v527 = vand.u32 %v525, 31
        %v528 = vsub.s32 32, %v527
        %v529 = vshrl.u32 683565275, %v528
        %v530 = vshll.u32 683565275, %v527
        %v531 = vshrl.u32 2475754826, %v528
        %v532 = vor.u32 %v530, %v531
        %v533 = vshll.u32 2475754826, %v527
        %v534 = vshrl.u32 2131351028, %v528
        %v535 = vor.u32 %v533, %v534
        %v536 = vshll.u32 2131351028, %v527
        %v537 = vshrl.u32 2102212464, %v528
        %v538 = vor.u32 %v536, %v537
        %v539 = vshll.u32 2102212464, %v527
        %v540 = vshrl.u32 920167782, %v528
        %v541 = vor.u32 %v539, %v540
        %v542 = vshll.u32 920167782, %v527
        %v543 = vshrl.u32 1326507024, %v528
        %v544 = vor.u32 %v542, %v543
        %vm545 = vcmp.lt.s32.totalorder %v526, 1
        %vm546 = vcmp.lt.s32.totalorder %v526, 2
        %vm547 = vcmp.lt.s32.totalorder %v526, 3
        %vm548 = vcmp.lt.s32.totalorder %v526, 4
        %v549 = vsel %vm545, %v529, %v532
        %v550 = vsel %vm548, %v538, 2102212464
        %v551 = vsel %vm547, %v535, %v550
        %v552 = vsel %vm546, %v549, %v551
        %v553 = vsel %vm545, %v532, %v535
        %v554 = vsel %vm548, %v541, 920167782
        %v555 = vsel %vm547, %v538, %v554
        %v556 = vsel %vm546, %v553, %v555
        %v557 = vsel %vm545, %v535, %v538
        %v558 = vsel %vm548, %v544, 1326507024
        %v559 = vsel %vm547, %v541, %v558
        %v560 = vsel %vm546, %v557, %v559
        %v561 = vshll.u32 %v521, 8
        %v562 = vmul.u32.u64.compose %v561, %v560
        %v563 = vextract.low.u32 %v562
        %v564 = vextract.high.u32 %v562
        %v565 = vmul.u32.u64.compose %v561, %v556
        %v566 = vextract.low.u32 %v565
        %v567 = vextract.high.u32 %v565
        %v568 = vmul.u32 %v561, %v552
        %v569 = vadd.s32 %v564, %v566
        %vm570 = vc.u32 %v564, %v566
        %v571 = vadd.s32 %v567, 1
        %v572 = vsel %vm570, %v571, %v567
        %v573 = vadd.s32 %v568, %v572
        %v574 = vadd.s32 %v573, 536870912
        %v575 = vshrl.u32 %v574, 30
        %v576 = vshll.u32 %v575, 30
        %v577 = vsub.s32 %v573, %v576
        %vm578 = vcmp.lt.s32.totalorder %v577, 0
        %v579 = vsub.s32 0, %v577
        %v580 = vsel %vm578, %v579, %v577
        %v581 = vclz %v580
        %v582 = vsub.s32 %v581, 2
        %vm583 = vcmp.gt.s32.totalorder 0, %v582
        %v584 = vsel %vm583, 0, %v582
        %v585 = vsub.s32 32, %v584
        %v586 = vshll.u32 %v577, %v584
        %v587 = vshrl.u32 %v569, %v585
        %v588 = vor.u32 %v586, %v587
        %v589 = vsub.s32 4294967266, %v584
        %v590 = vadd.s32 %v589, 127
        %v591 = vshll.u32 %v590, 23
        %v592 = vor.u32 4788187, %v591
        %v593 = vand.u32 2147483647, %v592
        %v595 = vcvt.s32.f32 %v588
        %v596 = vmul.f32 %v595, %v593
        %v597 = vxor.u32 %v596, 2147483648
        %v598 = vsel %vm515, %v597, %v596
        %v599 = vsub.s32 4, %v575
        %v600 = vsel %vm515, %v599, %v575
        %v601 = vsel %vm514, %v479, %v598
        %v602 = vsel %vm514, 0, %v600
        %v603 = vcosq.f32.pop %v601
        %v604 = vsinq.f32.pop %v601
        %vm605 = vweird.f32 %v479
        %v606 = vand.u32 %v602, 3
        %vm607 = vcmp.lt.s32.totalorder %v606, 2
        %vm608 = vcmp.eq.s32.totalorder %v606, 0
        %v609 = vxor.u32 %v604, 2147483648
        %v610 = vsel %vm608, %v603, %v609
        %vm611 = vcmp.eq.s32.totalorder %v606, 2
        %v612 = vxor.u32 %v603, 2147483648
        %v613 = vsel %vm611, %v612, %v604
        %v614 = vsel %vm607, %v610, %v613
        %v615 = vsel %vm605, nan, %v614
        %v616 = vand.u32 2147483647, %v482
        %vm617 = vcmp.le.f32.partialorder %v616, 0.7853982
        %vm618 = vcmp.lt.s32.totalorder %v482, 0
        %v619 = vand.u32 %v482, 2139095040
        %v620 = vshrl.u32 %v619, 23
        %v621 = vsub.s32 %v620, 127
        %v622 = vand.u32 2147483647, %v482
        %v623 = vand.u32 %v622, 8388607
        %v624 = vor.u32 %v623, 8388608
        %v625 = vsub.s32 0, %v624
        %v626 = vadd.s32 %v621, 1
        %vm627 = vcmp.gt.s32.totalorder %v626, 0
        %v628 = vsel %vm627, %v626, 0
        %v629 = vshrl.u32 %v628, 5
        %v630 = vand.u32 %v628, 31
        %v631 = vsub.s32 32, %v630
        %v632 = vshrl.u32 683565275, %v631
        %v633 = vshll.u32 683565275, %v630
        %v634 = vshrl.u32 2475754826, %v631
        %v635 = vor.u32 %v633, %v634
        %v636 = vshll.u32 2475754826, %v630
        %v637 = vshrl.u32 2131351028, %v631
        %v638 = vor.u32 %v636, %v637
        %v639 = vshll.u32 2131351028, %v630
        %v640 = vshrl.u32 2102212464, %v631
        %v641 = vor.u32 %v639, %v640
        %v642 = vshll.u32 2102212464, %v630
        %v643 = vshrl.u32 920167782, %v631
        %v644 = vor.u32 %v642, %v643
        %v645 = vshll.u32 920167782, %v630
        %v646 = vshrl.u32 1326507024, %v631
        %v647 = vor.u32 %v645, %v646
        %vm648 = vcmp.lt.s32.totalorder %v629, 1
        %vm649 = vcmp.lt.s32.totalorder %v629, 2
        %vm650 = vcmp.lt.s32.totalorder %v629, 3
        %vm651 = vcmp.lt.s32.totalorder %v629, 4
        %v652 = vsel %vm648, %v632, %v635
        %v653 = vsel %vm651, %v641, 2102212464
        %v654 = vsel %vm650, %v638, %v653
        %v655 = vsel %vm649, %v652, %v654
        %v656 = vsel %vm648, %v635, %v638
        %v657 = vsel %vm651, %v644, 920167782
        %v658 = vsel %vm650, %v641, %v657
        %v659 = vsel %vm649, %v656, %v658
        %v660 = vsel %vm648, %v638, %v641
        %v661 = vsel %vm651, %v647, 1326507024
        %v662 = vsel %vm650, %v644, %v661
        %v663 = vsel %vm649, %v660, %v662
        %v664 = vshll.u32 %v624, 8
        %v665 = vmul.u32.u64.compose %v664, %v663
        %v666 = vextract.low.u32 %v665
        %v667 = vextract.high.u32 %v665
        %v668 = vmul.u32.u64.compose %v664, %v659
        %v669 = vextract.low.u32 %v668
        %v670 = vextract.high.u32 %v668
        %v671 = vmul.u32 %v664, %v655
        %v672 = vadd.s32 %v667, %v669
        %vm673 = vc.u32 %v667, %v669
        %v674 = vadd.s32 %v670, 1
        %v675 = vsel %vm673, %v674, %v670
        %v676 = vadd.s32 %v671, %v675
        %v677 = vadd.s32 %v676, 536870912
        %v678 = vshrl.u32 %v677, 30
        %v679 = vshll.u32 %v678, 30
        %v680 = vsub.s32 %v676, %v679
        %vm681 = vcmp.lt.s32.totalorder %v680, 0
        %v682 = vsub.s32 0, %v680
        %v683 = vsel %vm681, %v682, %v680
        %v684 = vclz %v683
        %v685 = vsub.s32 %v684, 2
        %vm686 = vcmp.gt.s32.totalorder 0, %v685
        %v687 = vsel %vm686, 0, %v685
        %v688 = vsub.s32 32, %v687
        %v689 = vshll.u32 %v680, %v687
        %v690 = vshrl.u32 %v672, %v688
        %v691 = vor.u32 %v689, %v690
        %v692 = vsub.s32 4294967266, %v687
        %v693 = vadd.s32 %v692, 127
        %v694 = vshll.u32 %v693, 23
        %v695 = vor.u32 4788187, %v694
        %v696 = vand.u32 2147483647, %v695
        %v698 = vcvt.s32.f32 %v691
        %v699 = vmul.f32 %v698, %v696
        %v700 = vxor.u32 %v699, 2147483648
        %v701 = vsel %vm618, %v700, %v699
        %v702 = vsub.s32 4, %v678
        %v703 = vsel %vm618, %v702, %v678
        %v704 = vsel %vm617, %v482, %v701
        %v705 = vsel %vm617, 0, %v703
        %v706 = vcosq.f32.pop %v704
        %v707 = vsinq.f32.pop %v704
        %vm708 = vweird.f32 %v482
        %v709 = vand.u32 %v705, 3
        %vm710 = vcmp.lt.s32.totalorder %v709, 2
        %vm711 = vcmp.eq.s32.totalorder %v709, 0
        %v712 = vxor.u32 %v707, 2147483648
        %v713 = vsel %vm711, %v706, %v712
        %vm714 = vcmp.eq.s32.totalorder %v709, 2
        %v715 = vxor.u32 %v706, 2147483648
        %v716 = vsel %vm714, %v715, %v707
        %v717 = vsel %vm710, %v713, %v716
        %v718 = vsel %vm708, nan, %v717
        %v719 = vand.u32 2147483647, %v487
        %vm720 = vcmp.le.f32.partialorder %v719, 0.7853982
        %vm721 = vcmp.lt.s32.totalorder %v487, 0
        %v722 = vand.u32 %v487, 2139095040
        %v723 = vshrl.u32 %v722, 23
        %v724 = vsub.s32 %v723, 127
        %v725 = vand.u32 2147483647, %v487
        %v726 = vand.u32 %v725, 8388607
        %v727 = vor.u32 %v726, 8388608
        %v728 = vsub.s32 0, %v727
        %v729 = vadd.s32 %v724, 1
        %vm730 = vcmp.gt.s32.totalorder %v729, 0
        %v731 = vsel %vm730, %v729, 0
        %v732 = vshrl.u32 %v731, 5
        %v733 = vand.u32 %v731, 31
        %v734 = vsub.s32 32, %v733
        %v735 = vshrl.u32 683565275, %v734
        %v736 = vshll.u32 683565275, %v733
        %v737 = vshrl.u32 2475754826, %v734
        %v738 = vor.u32 %v736, %v737
        %v739 = vshll.u32 2475754826, %v733
        %v740 = vshrl.u32 2131351028, %v734
        %v741 = vor.u32 %v739, %v740
        %v742 = vshll.u32 2131351028, %v733
        %v743 = vshrl.u32 2102212464, %v734
        %v744 = vor.u32 %v742, %v743
        %v745 = vshll.u32 2102212464, %v733
        %v746 = vshrl.u32 920167782, %v734
        %v747 = vor.u32 %v745, %v746
        %v748 = vshll.u32 920167782, %v733
        %v749 = vshrl.u32 1326507024, %v734
        %v750 = vor.u32 %v748, %v749
        %vm751 = vcmp.lt.s32.totalorder %v732, 1
        %vm752 = vcmp.lt.s32.totalorder %v732, 2
        %vm753 = vcmp.lt.s32.totalorder %v732, 3
        %vm754 = vcmp.lt.s32.totalorder %v732, 4
        %v755 = vsel %vm751, %v735, %v738
        %v756 = vsel %vm754, %v744, 2102212464
        %v757 = vsel %vm753, %v741, %v756
        %v758 = vsel %vm752, %v755, %v757
        %v759 = vsel %vm751, %v738, %v741
        %v760 = vsel %vm754, %v747, 920167782
        %v761 = vsel %vm753, %v744, %v760
        %v762 = vsel %vm752, %v759, %v761
        %v763 = vsel %vm751, %v741, %v744
        %v764 = vsel %vm754, %v750, 1326507024
        %v765 = vsel %vm753, %v747, %v764
        %v766 = vsel %vm752, %v763, %v765
        %v767 = vshll.u32 %v727, 8
        %v768 = vmul.u32.u64.compose %v767, %v766
        %v769 = vextract.low.u32 %v768
        %v770 = vextract.high.u32 %v768
        %v771 = vmul.u32.u64.compose %v767, %v762
        %v772 = vextract.low.u32 %v771
        %v773 = vextract.high.u32 %v771
        %v774 = vmul.u32 %v767, %v758
        %v775 = vadd.s32 %v770, %v772
        %vm776 = vc.u32 %v770, %v772
        %v777 = vadd.s32 %v773, 1
        %v778 = vsel %vm776, %v777, %v773
        %v779 = vadd.s32 %v774, %v778
        %v780 = vadd.s32 %v779, 536870912
        %v781 = vshrl.u32 %v780, 30
        %v782 = vshll.u32 %v781, 30
        %v783 = vsub.s32 %v779, %v782
        %vm784 = vcmp.lt.s32.totalorder %v783, 0
        %v785 = vsub.s32 0, %v783
        %v786 = vsel %vm784, %v785, %v783
        %v787 = vclz %v786
        %v788 = vsub.s32 %v787, 2
        %vm789 = vcmp.gt.s32.totalorder 0, %v788
        %v790 = vsel %vm789, 0, %v788
        %v791 = vsub.s32 32, %v790
        %v792 = vshll.u32 %v783, %v790
        %v793 = vshrl.u32 %v775, %v791
        %v794 = vor.u32 %v792, %v793
        %v795 = vsub.s32 4294967266, %v790
        %v796 = vadd.s32 %v795, 127
        %v797 = vshll.u32 %v796, 23
        %v798 = vor.u32 4788187, %v797
        %v799 = vand.u32 2147483647, %v798
        %v801 = vcvt.s32.f32 %v794
        %v802 = vmul.f32 %v801, %v799
        %v803 = vxor.u32 %v802, 2147483648
        %v804 = vsel %vm721, %v803, %v802
        %v805 = vsub.s32 4, %v781
        %v806 = vsel %vm721, %v805, %v781
        %v807 = vsel %vm720, %v487, %v804
        %v808 = vsel %vm720, 0, %v806
        %v809 = vcosq.f32.pop %v807
        %v810 = vsinq.f32.pop %v807
        %vm811 = vweird.f32 %v487
        %v812 = vand.u32 %v808, 3
        %vm813 = vcmp.lt.s32.totalorder %v812, 2
        %vm814 = vcmp.eq.s32.totalorder %v812, 0
        %v815 = vxor.u32 %v810, 2147483648
        %v816 = vsel %vm814, %v809, %v815
        %vm817 = vcmp.eq.s32.totalorder %v812, 2
        %v818 = vxor.u32 %v809, 2147483648
        %v819 = vsel %vm817, %v818, %v810
        %v820 = vsel %vm813, %v816, %v819
        %v821 = vsel %vm811, nan, %v820
        %v822 = vand.u32 2147483647, %v490
        %vm823 = vcmp.le.f32.partialorder %v822, 0.7853982
        %vm824 = vcmp.lt.s32.totalorder %v490, 0
        %v825 = vand.u32 %v490, 2139095040
        %v826 = vshrl.u32 %v825, 23
        %v827 = vsub.s32 %v826, 127
        %v828 = vand.u32 2147483647, %v490
        %v829 = vand.u32 %v828, 8388607
        %v830 = vor.u32 %v829, 8388608
        %v831 = vsub.s32 0, %v830
        %v832 = vadd.s32 %v827, 1
        %vm833 = vcmp.gt.s32.totalorder %v832, 0
        %v834 = vsel %vm833, %v832, 0
        %v835 = vshrl.u32 %v834, 5
        %v836 = vand.u32 %v834, 31
        %v837 = vsub.s32 32, %v836
        %v838 = vshrl.u32 683565275, %v837
        %v839 = vshll.u32 683565275, %v836
        %v840 = vshrl.u32 2475754826, %v837
        %v841 = vor.u32 %v839, %v840
        %v842 = vshll.u32 2475754826, %v836
        %v843 = vshrl.u32 2131351028, %v837
        %v844 = vor.u32 %v842, %v843
        %v845 = vshll.u32 2131351028, %v836
        %v846 = vshrl.u32 2102212464, %v837
        %v847 = vor.u32 %v845, %v846
        %v848 = vshll.u32 2102212464, %v836
        %v849 = vshrl.u32 920167782, %v837
        %v850 = vor.u32 %v848, %v849
        %v851 = vshll.u32 920167782, %v836
        %v852 = vshrl.u32 1326507024, %v837
        %v853 = vor.u32 %v851, %v852
        %vm854 = vcmp.lt.s32.totalorder %v835, 1
        %vm855 = vcmp.lt.s32.totalorder %v835, 2
        %vm856 = vcmp.lt.s32.totalorder %v835, 3
        %vm857 = vcmp.lt.s32.totalorder %v835, 4
        %v858 = vsel %vm854, %v838, %v841
        %v859 = vsel %vm857, %v847, 2102212464
        %v860 = vsel %vm856, %v844, %v859
        %v861 = vsel %vm855, %v858, %v860
        %v862 = vsel %vm854, %v841, %v844
        %v863 = vsel %vm857, %v850, 920167782
        %v864 = vsel %vm856, %v847, %v863
        %v865 = vsel %vm855, %v862, %v864
        %v866 = vsel %vm854, %v844, %v847
        %v867 = vsel %vm857, %v853, 1326507024
        %v868 = vsel %vm856, %v850, %v867
        %v869 = vsel %vm855, %v866, %v868
        %v870 = vshll.u32 %v830, 8
        %v871 = vmul.u32.u64.compose %v870, %v869
        %v872 = vextract.low.u32 %v871
        %v873 = vextract.high.u32 %v871
        %v874 = vmul.u32.u64.compose %v870, %v865
        %v875 = vextract.low.u32 %v874
        %v876 = vextract.high.u32 %v874
        %v877 = vmul.u32 %v870, %v861
        %v878 = vadd.s32 %v873, %v875
        %vm879 = vc.u32 %v873, %v875
        %v880 = vadd.s32 %v876, 1
        %v881 = vsel %vm879, %v880, %v876
        %v882 = vadd.s32 %v877, %v881
        %v883 = vadd.s32 %v882, 536870912
        %v884 = vshrl.u32 %v883, 30
        %v885 = vshll.u32 %v884, 30
        %v886 = vsub.s32 %v882, %v885
        %vm887 = vcmp.lt.s32.totalorder %v886, 0
        %v888 = vsub.s32 0, %v886
        %v889 = vsel %vm887, %v888, %v886
        %v890 = vclz %v889
        %v891 = vsub.s32 %v890, 2
        %vm892 = vcmp.gt.s32.totalorder 0, %v891
        %v893 = vsel %vm892, 0, %v891
        %v894 = vsub.s32 32, %v893
        %v895 = vshll.u32 %v886, %v893
        %v896 = vshrl.u32 %v878, %v894
        %v897 = vor.u32 %v895, %v896
        %v898 = vsub.s32 4294967266, %v893
        %v899 = vadd.s32 %v898, 127
        %v900 = vshll.u32 %v899, 23
        %v901 = vor.u32 4788187, %v900
        %v902 = vand.u32 2147483647, %v901
        %v904 = vcvt.s32.f32 %v897
        %v905 = vmul.f32 %v904, %v902
        %v906 = vxor.u32 %v905, 2147483648
        %v907 = vsel %vm824, %v906, %v905
        %v908 = vsub.s32 4, %v884
        %v909 = vsel %vm824, %v908, %v884
        %v910 = vsel %vm823, %v490, %v907
        %v911 = vsel %vm823, 0, %v909
        %v912 = vcosq.f32.pop %v910
        %v913 = vsinq.f32.pop %v910
        %vm914 = vweird.f32 %v490
        %v915 = vand.u32 %v911, 3
        %vm916 = vcmp.lt.s32.totalorder %v915, 2
        %vm917 = vcmp.eq.s32.totalorder %v915, 0
        %v918 = vxor.u32 %v913, 2147483648
        %v919 = vsel %vm917, %v912, %v918
        %vm920 = vcmp.eq.s32.totalorder %v915, 2
        %v921 = vxor.u32 %v912, 2147483648
        %v922 = vsel %vm920, %v921, %v913
        %v923 = vsel %vm916, %v919, %v922
        %v924 = vsel %vm914, nan, %v923
        %v925 = vand.u32 2147483647, %v495
        %vm926 = vcmp.le.f32.partialorder %v925, 0.7853982
        %vm927 = vcmp.lt.s32.totalorder %v495, 0
        %v928 = vand.u32 %v495, 2139095040
        %v929 = vshrl.u32 %v928, 23
        %v930 = vsub.s32 %v929, 127
        %v931 = vand.u32 2147483647, %v495
        %v932 = vand.u32 %v931, 8388607
        %v933 = vor.u32 %v932, 8388608
        %v934 = vsub.s32 0, %v933
        %v935 = vadd.s32 %v930, 1
        %vm936 = vcmp.gt.s32.totalorder %v935, 0
        %v937 = vsel %vm936, %v935, 0
        %v938 = vshrl.u32 %v937, 5
        %v939 = vand.u32 %v937, 31
        %v940 = vsub.s32 32, %v939
        %v941 = vshrl.u32 683565275, %v940
        %v942 = vshll.u32 683565275, %v939
        %v943 = vshrl.u32 2475754826, %v940
        %v944 = vor.u32 %v942, %v943
        %v945 = vshll.u32 2475754826, %v939
        %v946 = vshrl.u32 2131351028, %v940
        %v947 = vor.u32 %v945, %v946
        %v948 = vshll.u32 2131351028, %v939
        %v949 = vshrl.u32 2102212464, %v940
        %v950 = vor.u32 %v948, %v949
        %v951 = vshll.u32 2102212464, %v939
        %v952 = vshrl.u32 920167782, %v940
        %v953 = vor.u32 %v951, %v952
        %v954 = vshll.u32 920167782, %v939
        %v955 = vshrl.u32 1326507024, %v940
        %v956 = vor.u32 %v954, %v955
        %vm957 = vcmp.lt.s32.totalorder %v938, 1
        %vm958 = vcmp.lt.s32.totalorder %v938, 2
        %vm959 = vcmp.lt.s32.totalorder %v938, 3
        %vm960 = vcmp.lt.s32.totalorder %v938, 4
        %v961 = vsel %vm957, %v941, %v944
        %v962 = vsel %vm960, %v950, 2102212464
        %v963 = vsel %vm959, %v947, %v962
        %v964 = vsel %vm958, %v961, %v963
        %v965 = vsel %vm957, %v944, %v947
        %v966 = vsel %vm960, %v953, 920167782
        %v967 = vsel %vm959, %v950, %v966
        %v968 = vsel %vm958, %v965, %v967
        %v969 = vsel %vm957, %v947, %v950
        %v970 = vsel %vm960, %v956, 1326507024
        %v971 = vsel %vm959, %v953, %v970
        %v972 = vsel %vm958, %v969, %v971
        %v973 = vshll.u32 %v933, 8
        %v974 = vmul.u32.u64.compose %v973, %v972
        %v975 = vextract.low.u32 %v974
        %v976 = vextract.high.u32 %v974
        %v977 = vmul.u32.u64.compose %v973, %v968
        %v978 = vextract.low.u32 %v977
        %v979 = vextract.high.u32 %v977
        %v980 = vmul.u32 %v973, %v964
        %v981 = vadd.s32 %v976, %v978
        %vm982 = vc.u32 %v976, %v978
        %v983 = vadd.s32 %v979, 1
        %v984 = vsel %vm982, %v983, %v979
        %v985 = vadd.s32 %v980, %v984
        %v986 = vadd.s32 %v985, 536870912
        %v987 = vshrl.u32 %v986, 30
        %v988 = vshll.u32 %v987, 30
        %v989 = vsub.s32 %v985, %v988
        %vm990 = vcmp.lt.s32.totalorder %v989, 0
        %v991 = vsub.s32 0, %v989
        %v992 = vsel %vm990, %v991, %v989
        %v993 = vclz %v992
        %v994 = vsub.s32 %v993, 2
        %vm995 = vcmp.gt.s32.totalorder 0, %v994
        %v996 = vsel %vm995, 0, %v994
        %v997 = vsub.s32 32, %v996
        %v998 = vshll.u32 %v989, %v996
        %v999 = vshrl.u32 %v981, %v997
        %v1000 = vor.u32 %v998, %v999
        %v1001 = vsub.s32 4294967266, %v996
        %v1002 = vadd.s32 %v1001, 127
        %v1003 = vshll.u32 %v1002, 23
        %v1004 = vor.u32 4788187, %v1003
        %v1005 = vand.u32 2147483647, %v1004
        %v1007 = vcvt.s32.f32 %v1000
        %v1008 = vmul.f32 %v1007, %v1005
        %v1009 = vxor.u32 %v1008, 2147483648
        %v1010 = vsel %vm927, %v1009, %v1008
        %v1011 = vsub.s32 4, %v987
        %v1012 = vsel %vm927, %v1011, %v987
        %v1013 = vsel %vm926, %v495, %v1010
        %v1014 = vsel %vm926, 0, %v1012
        %v1015 = vcosq.f32.pop %v1013
        %v1016 = vsinq.f32.pop %v1013
        %vm1017 = vweird.f32 %v495
        %v1018 = vand.u32 %v1014, 3
        %vm1019 = vcmp.lt.s32.totalorder %v1018, 2
        %vm1020 = vcmp.eq.s32.totalorder %v1018, 0
        %v1021 = vxor.u32 %v1016, 2147483648
        %v1022 = vsel %vm1020, %v1015, %v1021
        %vm1023 = vcmp.eq.s32.totalorder %v1018, 2
        %v1024 = vxor.u32 %v1015, 2147483648
        %v1025 = vsel %vm1023, %v1024, %v1016
        %v1026 = vsel %vm1019, %v1022, %v1025
        %v1027 = vsel %vm1017, nan, %v1026
        %v1028 = vand.u32 2147483647, %v498
        %vm1029 = vcmp.le.f32.partialorder %v1028, 0.7853982
        %vm1030 = vcmp.lt.s32.totalorder %v498, 0
        %v1031 = vand.u32 %v498, 2139095040
        %v1032 = vshrl.u32 %v1031, 23
        %v1033 = vsub.s32 %v1032, 127
        %v1034 = vand.u32 2147483647, %v498
        %v1035 = vand.u32 %v1034, 8388607
        %v1036 = vor.u32 %v1035, 8388608
        %v1037 = vsub.s32 0, %v1036
        %v1038 = vadd.s32 %v1033, 1
        %vm1039 = vcmp.gt.s32.totalorder %v1038, 0
        %v1040 = vsel %vm1039, %v1038, 0
        %v1041 = vshrl.u32 %v1040, 5
        %v1042 = vand.u32 %v1040, 31
        %v1043 = vsub.s32 32, %v1042
        %v1044 = vshrl.u32 683565275, %v1043
        %v1045 = vshll.u32 683565275, %v1042
        %v1046 = vshrl.u32 2475754826, %v1043
        %v1047 = vor.u32 %v1045, %v1046
        %v1048 = vshll.u32 2475754826, %v1042
        %v1049 = vshrl.u32 2131351028, %v1043
        %v1050 = vor.u32 %v1048, %v1049
        %v1051 = vshll.u32 2131351028, %v1042
        %v1052 = vshrl.u32 2102212464, %v1043
        %v1053 = vor.u32 %v1051, %v1052
        %v1054 = vshll.u32 2102212464, %v1042
        %v1055 = vshrl.u32 920167782, %v1043
        %v1056 = vor.u32 %v1054, %v1055
        %v1057 = vshll.u32 920167782, %v1042
        %v1058 = vshrl.u32 1326507024, %v1043
        %v1059 = vor.u32 %v1057, %v1058
        %vm1060 = vcmp.lt.s32.totalorder %v1041, 1
        %vm1061 = vcmp.lt.s32.totalorder %v1041, 2
        %vm1062 = vcmp.lt.s32.totalorder %v1041, 3
        %vm1063 = vcmp.lt.s32.totalorder %v1041, 4
        %v1064 = vsel %vm1060, %v1044, %v1047
        %v1065 = vsel %vm1063, %v1053, 2102212464
        %v1066 = vsel %vm1062, %v1050, %v1065
        %v1067 = vsel %vm1061, %v1064, %v1066
        %v1068 = vsel %vm1060, %v1047, %v1050
        %v1069 = vsel %vm1063, %v1056, 920167782
        %v1070 = vsel %vm1062, %v1053, %v1069
        %v1071 = vsel %vm1061, %v1068, %v1070
        %v1072 = vsel %vm1060, %v1050, %v1053
        %v1073 = vsel %vm1063, %v1059, 1326507024
        %v1074 = vsel %vm1062, %v1056, %v1073
        %v1075 = vsel %vm1061, %v1072, %v1074
        %v1076 = vshll.u32 %v1036, 8
        %v1077 = vmul.u32.u64.compose %v1076, %v1075
        %v1078 = vextract.low.u32 %v1077
        %v1079 = vextract.high.u32 %v1077
        %v1080 = vmul.u32.u64.compose %v1076, %v1071
        %v1081 = vextract.low.u32 %v1080
        %v1082 = vextract.high.u32 %v1080
        %v1083 = vmul.u32 %v1076, %v1067
        %v1084 = vadd.s32 %v1079, %v1081
        %vm1085 = vc.u32 %v1079, %v1081
        %v1086 = vadd.s32 %v1082, 1
        %v1087 = vsel %vm1085, %v1086, %v1082
        %v1088 = vadd.s32 %v1083, %v1087
        %v1089 = vadd.s32 %v1088, 536870912
        %v1090 = vshrl.u32 %v1089, 30
        %v1091 = vshll.u32 %v1090, 30
        %v1092 = vsub.s32 %v1088, %v1091
        %vm1093 = vcmp.lt.s32.totalorder %v1092, 0
        %v1094 = vsub.s32 0, %v1092
        %v1095 = vsel %vm1093, %v1094, %v1092
        %v1096 = vclz %v1095
        %v1097 = vsub.s32 %v1096, 2
        %vm1098 = vcmp.gt.s32.totalorder 0, %v1097
        %v1099 = vsel %vm1098, 0, %v1097
        %v1100 = vsub.s32 32, %v1099
        %v1101 = vshll.u32 %v1092, %v1099
        %v1102 = vshrl.u32 %v1084, %v1100
        %v1103 = vor.u32 %v1101, %v1102
        %v1104 = vsub.s32 4294967266, %v1099
        %v1105 = vadd.s32 %v1104, 127
        %v1106 = vshll.u32 %v1105, 23
        %v1107 = vor.u32 4788187, %v1106
        %v1108 = vand.u32 2147483647, %v1107
        %v1110 = vcvt.s32.f32 %v1103
        %v1111 = vmul.f32 %v1110, %v1108
        %v1112 = vxor.u32 %v1111, 2147483648
        %v1113 = vsel %vm1030, %v1112, %v1111
        %v1114 = vsub.s32 4, %v1090
        %v1115 = vsel %vm1030, %v1114, %v1090
        %v1116 = vsel %vm1029, %v498, %v1113
        %v1117 = vsel %vm1029, 0, %v1115
        %v1118 = vcosq.f32.pop %v1116
        %v1119 = vsinq.f32.pop %v1116
        %vm1120 = vweird.f32 %v498
        %v1121 = vand.u32 %v1117, 3
        %vm1122 = vcmp.lt.s32.totalorder %v1121, 2
        %vm1123 = vcmp.eq.s32.totalorder %v1121, 0
        %v1124 = vxor.u32 %v1119, 2147483648
        %v1125 = vsel %vm1123, %v1118, %v1124
        %vm1126 = vcmp.eq.s32.totalorder %v1121, 2
        %v1127 = vxor.u32 %v1118, 2147483648
        %v1128 = vsel %vm1126, %v1127, %v1119
        %v1129 = vsel %vm1122, %v1125, %v1128
        %v1130 = vsel %vm1120, nan, %v1129
        %v1131 = vmul.f32 %v502, %v615
        %v1132 = vmul.f32 %v504, %v718
        %v1133 = vmul.f32 %v506, %v821
        %v1134 = vmul.f32 %v508, %v924
        %v1135 = vmul.f32 %v510, %v1027
        %v1136 = vmul.f32 %v512, %v1130
        %v1137 = vand.u32 2147483647, %v479
        %vm1138 = vcmp.le.f32.partialorder %v1137, 0.7853982
        %vm1139 = vcmp.lt.s32.totalorder %v479, 0
        %v1140 = vand.u32 %v479, 2139095040
        %v1141 = vshrl.u32 %v1140, 23
        %v1142 = vsub.s32 %v1141, 127
        %v1143 = vand.u32 2147483647, %v479
        %v1144 = vand.u32 %v1143, 8388607
        %v1145 = vor.u32 %v1144, 8388608
        %v1146 = vsub.s32 0, %v1145
        %v1147 = vadd.s32 %v1142, 1
        %vm1148 = vcmp.gt.s32.totalorder %v1147, 0
        %v1149 = vsel %vm1148, %v1147, 0
        %v1150 = vshrl.u32 %v1149, 5
        %v1151 = vand.u32 %v1149, 31
        %v1152 = vsub.s32 32, %v1151
        %v1153 = vshrl.u32 683565275, %v1152
        %v1154 = vshll.u32 683565275, %v1151
        %v1155 = vshrl.u32 2475754826, %v1152
        %v1156 = vor.u32 %v1154, %v1155
        %v1157 = vshll.u32 2475754826, %v1151
        %v1158 = vshrl.u32 2131351028, %v1152
        %v1159 = vor.u32 %v1157, %v1158
        %v1160 = vshll.u32 2131351028, %v1151
        %v1161 = vshrl.u32 2102212464, %v1152
        %v1162 = vor.u32 %v1160, %v1161
        %v1163 = vshll.u32 2102212464, %v1151
        %v1164 = vshrl.u32 920167782, %v1152
        %v1165 = vor.u32 %v1163, %v1164
        %v1166 = vshll.u32 920167782, %v1151
        %v1167 = vshrl.u32 1326507024, %v1152
        %v1168 = vor.u32 %v1166, %v1167
        %vm1169 = vcmp.lt.s32.totalorder %v1150, 1
        %vm1170 = vcmp.lt.s32.totalorder %v1150, 2
        %vm1171 = vcmp.lt.s32.totalorder %v1150, 3
        %vm1172 = vcmp.lt.s32.totalorder %v1150, 4
        %v1173 = vsel %vm1169, %v1153, %v1156
        %v1174 = vsel %vm1172, %v1162, 2102212464
        %v1175 = vsel %vm1171, %v1159, %v1174
        %v1176 = vsel %vm1170, %v1173, %v1175
        %v1177 = vsel %vm1169, %v1156, %v1159
        %v1178 = vsel %vm1172, %v1165, 920167782
        %v1179 = vsel %vm1171, %v1162, %v1178
        %v1180 = vsel %vm1170, %v1177, %v1179
        %v1181 = vsel %vm1169, %v1159, %v1162
        %v1182 = vsel %vm1172, %v1168, 1326507024
        %v1183 = vsel %vm1171, %v1165, %v1182
        %v1184 = vsel %vm1170, %v1181, %v1183
        %v1185 = vshll.u32 %v1145, 8
        %v1186 = vmul.u32.u64.compose %v1185, %v1184
        %v1187 = vextract.low.u32 %v1186
        %v1188 = vextract.high.u32 %v1186
        %v1189 = vmul.u32.u64.compose %v1185, %v1180
        %v1190 = vextract.low.u32 %v1189
        %v1191 = vextract.high.u32 %v1189
        %v1192 = vmul.u32 %v1185, %v1176
        %v1193 = vadd.s32 %v1188, %v1190
        %vm1194 = vc.u32 %v1188, %v1190
        %v1195 = vadd.s32 %v1191, 1
        %v1196 = vsel %vm1194, %v1195, %v1191
        %v1197 = vadd.s32 %v1192, %v1196
        %v1198 = vadd.s32 %v1197, 536870912
        %v1199 = vshrl.u32 %v1198, 30
        %v1200 = vshll.u32 %v1199, 30
        %v1201 = vsub.s32 %v1197, %v1200
        %vm1202 = vcmp.lt.s32.totalorder %v1201, 0
        %v1203 = vsub.s32 0, %v1201
        %v1204 = vsel %vm1202, %v1203, %v1201
        %v1205 = vclz %v1204
        %v1206 = vsub.s32 %v1205, 2
        %vm1207 = vcmp.gt.s32.totalorder 0, %v1206
        %v1208 = vsel %vm1207, 0, %v1206
        %v1209 = vsub.s32 32, %v1208
        %v1210 = vshll.u32 %v1201, %v1208
        %v1211 = vshrl.u32 %v1193, %v1209
        %v1212 = vor.u32 %v1210, %v1211
        %v1213 = vsub.s32 4294967266, %v1208
        %v1214 = vadd.s32 %v1213, 127
        %v1215 = vshll.u32 %v1214, 23
        %v1216 = vor.u32 4788187, %v1215
        %v1217 = vand.u32 2147483647, %v1216
        %v1219 = vcvt.s32.f32 %v1212
        %v1220 = vmul.f32 %v1219, %v1217
        %v1221 = vxor.u32 %v1220, 2147483648
        %v1222 = vsel %vm1139, %v1221, %v1220
        %v1223 = vsub.s32 4, %v1199
        %v1224 = vsel %vm1139, %v1223, %v1199
        %v1225 = vsel %vm1138, %v479, %v1222
        %v1226 = vsel %vm1138, 0, %v1224
        %v1227 = vcosq.f32.pop %v1225
        %v1228 = vsinq.f32.pop %v1225
        %vm1229 = vweird.f32 %v479
        %v1230 = vadd.s32 %v1226, 3
        %v1231 = vand.u32 %v1230, 3
        %vm1232 = vcmp.lt.s32.totalorder %v1231, 2
        %vm1233 = vcmp.eq.s32.totalorder %v1231, 0
        %v1234 = vxor.u32 %v1228, 2147483648
        %v1235 = vsel %vm1233, %v1227, %v1234
        %vm1236 = vcmp.eq.s32.totalorder %v1231, 2
        %v1237 = vxor.u32 %v1227, 2147483648
        %v1238 = vsel %vm1236, %v1237, %v1228
        %v1239 = vsel %vm1232, %v1235, %v1238
        %v1240 = vsel %vm1229, nan, %v1239
        %v1241 = vand.u32 2147483647, %v482
        %vm1242 = vcmp.le.f32.partialorder %v1241, 0.7853982
        %vm1243 = vcmp.lt.s32.totalorder %v482, 0
        %v1244 = vand.u32 %v482, 2139095040
        %v1245 = vshrl.u32 %v1244, 23
        %v1246 = vsub.s32 %v1245, 127
        %v1247 = vand.u32 2147483647, %v482
        %v1248 = vand.u32 %v1247, 8388607
        %v1249 = vor.u32 %v1248, 8388608
        %v1250 = vsub.s32 0, %v1249
        %v1251 = vadd.s32 %v1246, 1
        %vm1252 = vcmp.gt.s32.totalorder %v1251, 0
        %v1253 = vsel %vm1252, %v1251, 0
        %v1254 = vshrl.u32 %v1253, 5
        %v1255 = vand.u32 %v1253, 31
        %v1256 = vsub.s32 32, %v1255
        %v1257 = vshrl.u32 683565275, %v1256
        %v1258 = vshll.u32 683565275, %v1255
        %v1259 = vshrl.u32 2475754826, %v1256
        %v1260 = vor.u32 %v1258, %v1259
        %v1261 = vshll.u32 2475754826, %v1255
        %v1262 = vshrl.u32 2131351028, %v1256
        %v1263 = vor.u32 %v1261, %v1262
        %v1264 = vshll.u32 2131351028, %v1255
        %v1265 = vshrl.u32 2102212464, %v1256
        %v1266 = vor.u32 %v1264, %v1265
        %v1267 = vshll.u32 2102212464, %v1255
        %v1268 = vshrl.u32 920167782, %v1256
        %v1269 = vor.u32 %v1267, %v1268
        %v1270 = vshll.u32 920167782, %v1255
        %v1271 = vshrl.u32 1326507024, %v1256
        %v1272 = vor.u32 %v1270, %v1271
        %vm1273 = vcmp.lt.s32.totalorder %v1254, 1
        %vm1274 = vcmp.lt.s32.totalorder %v1254, 2
        %vm1275 = vcmp.lt.s32.totalorder %v1254, 3
        %vm1276 = vcmp.lt.s32.totalorder %v1254, 4
        %v1277 = vsel %vm1273, %v1257, %v1260
        %v1278 = vsel %vm1276, %v1266, 2102212464
        %v1279 = vsel %vm1275, %v1263, %v1278
        %v1280 = vsel %vm1274, %v1277, %v1279
        %v1281 = vsel %vm1273, %v1260, %v1263
        %v1282 = vsel %vm1276, %v1269, 920167782
        %v1283 = vsel %vm1275, %v1266, %v1282
        %v1284 = vsel %vm1274, %v1281, %v1283
        %v1285 = vsel %vm1273, %v1263, %v1266
        %v1286 = vsel %vm1276, %v1272, 1326507024
        %v1287 = vsel %vm1275, %v1269, %v1286
        %v1288 = vsel %vm1274, %v1285, %v1287
        %v1289 = vshll.u32 %v1249, 8
        %v1290 = vmul.u32.u64.compose %v1289, %v1288
        %v1291 = vextract.low.u32 %v1290
        %v1292 = vextract.high.u32 %v1290
        %v1293 = vmul.u32.u64.compose %v1289, %v1284
        %v1294 = vextract.low.u32 %v1293
        %v1295 = vextract.high.u32 %v1293
        %v1296 = vmul.u32 %v1289, %v1280
        %v1297 = vadd.s32 %v1292, %v1294
        %vm1298 = vc.u32 %v1292, %v1294
        %v1299 = vadd.s32 %v1295, 1
        %v1300 = vsel %vm1298, %v1299, %v1295
        %v1301 = vadd.s32 %v1296, %v1300
        %v1302 = vadd.s32 %v1301, 536870912
        %v1303 = vshrl.u32 %v1302, 30
        %v1304 = vshll.u32 %v1303, 30
        %v1305 = vsub.s32 %v1301, %v1304
        %vm1306 = vcmp.lt.s32.totalorder %v1305, 0
        %v1307 = vsub.s32 0, %v1305
        %v1308 = vsel %vm1306, %v1307, %v1305
        %v1309 = vclz %v1308
        %v1310 = vsub.s32 %v1309, 2
        %vm1311 = vcmp.gt.s32.totalorder 0, %v1310
        %v1312 = vsel %vm1311, 0, %v1310
        %v1313 = vsub.s32 32, %v1312
        %v1314 = vshll.u32 %v1305, %v1312
        %v1315 = vshrl.u32 %v1297, %v1313
        %v1316 = vor.u32 %v1314, %v1315
        %v1317 = vsub.s32 4294967266, %v1312
        %v1318 = vadd.s32 %v1317, 127
        %v1319 = vshll.u32 %v1318, 23
        %v1320 = vor.u32 4788187, %v1319
        %v1321 = vand.u32 2147483647, %v1320
        %v1323 = vcvt.s32.f32 %v1316
        %v1324 = vmul.f32 %v1323, %v1321
        %v1325 = vxor.u32 %v1324, 2147483648
        %v1326 = vsel %vm1243, %v1325, %v1324
        %v1327 = vsub.s32 4, %v1303
        %v1328 = vsel %vm1243, %v1327, %v1303
        %v1329 = vsel %vm1242, %v482, %v1326
        %v1330 = vsel %vm1242, 0, %v1328
        %v1331 = vcosq.f32.pop %v1329
        %v1332 = vsinq.f32.pop %v1329
        %vm1333 = vweird.f32 %v482
        %v1334 = vadd.s32 %v1330, 3
        %v1335 = vand.u32 %v1334, 3
        %vm1336 = vcmp.lt.s32.totalorder %v1335, 2
        %vm1337 = vcmp.eq.s32.totalorder %v1335, 0
        %v1338 = vxor.u32 %v1332, 2147483648
        %v1339 = vsel %vm1337, %v1331, %v1338
        %vm1340 = vcmp.eq.s32.totalorder %v1335, 2
        %v1341 = vxor.u32 %v1331, 2147483648
        %v1342 = vsel %vm1340, %v1341, %v1332
        %v1343 = vsel %vm1336, %v1339, %v1342
        %v1344 = vsel %vm1333, nan, %v1343
        %v1345 = vand.u32 2147483647, %v487
        %vm1346 = vcmp.le.f32.partialorder %v1345, 0.7853982
        %vm1347 = vcmp.lt.s32.totalorder %v487, 0
        %v1348 = vand.u32 %v487, 2139095040
        %v1349 = vshrl.u32 %v1348, 23
        %v1350 = vsub.s32 %v1349, 127
        %v1351 = vand.u32 2147483647, %v487
        %v1352 = vand.u32 %v1351, 8388607
        %v1353 = vor.u32 %v1352, 8388608
        %v1354 = vsub.s32 0, %v1353
        %v1355 = vadd.s32 %v1350, 1
        %vm1356 = vcmp.gt.s32.totalorder %v1355, 0
        %v1357 = vsel %vm1356, %v1355, 0
        %v1358 = vshrl.u32 %v1357, 5
        %v1359 = vand.u32 %v1357, 31
        %v1360 = vsub.s32 32, %v1359
        %v1361 = vshrl.u32 683565275, %v1360
        %v1362 = vshll.u32 683565275, %v1359
        %v1363 = vshrl.u32 2475754826, %v1360
        %v1364 = vor.u32 %v1362, %v1363
        %v1365 = vshll.u32 2475754826, %v1359
        %v1366 = vshrl.u32 2131351028, %v1360
        %v1367 = vor.u32 %v1365, %v1366
        %v1368 = vshll.u32 2131351028, %v1359
        %v1369 = vshrl.u32 2102212464, %v1360
        %v1370 = vor.u32 %v1368, %v1369
        %v1371 = vshll.u32 2102212464, %v1359
        %v1372 = vshrl.u32 920167782, %v1360
        %v1373 = vor.u32 %v1371, %v1372
        %v1374 = vshll.u32 920167782, %v1359
        %v1375 = vshrl.u32 1326507024, %v1360
        %v1376 = vor.u32 %v1374, %v1375
        %vm1377 = vcmp.lt.s32.totalorder %v1358, 1
        %vm1378 = vcmp.lt.s32.totalorder %v1358, 2
        %vm1379 = vcmp.lt.s32.totalorder %v1358, 3
        %vm1380 = vcmp.lt.s32.totalorder %v1358, 4
        %v1381 = vsel %vm1377, %v1361, %v1364
        %v1382 = vsel %vm1380, %v1370, 2102212464
        %v1383 = vsel %vm1379, %v1367, %v1382
        %v1384 = vsel %vm1378, %v1381, %v1383
        %v1385 = vsel %vm1377, %v1364, %v1367
        %v1386 = vsel %vm1380, %v1373, 920167782
        %v1387 = vsel %vm1379, %v1370, %v1386
        %v1388 = vsel %vm1378, %v1385, %v1387
        %v1389 = vsel %vm1377, %v1367, %v1370
        %v1390 = vsel %vm1380, %v1376, 1326507024
        %v1391 = vsel %vm1379, %v1373, %v1390
        %v1392 = vsel %vm1378, %v1389, %v1391
        %v1393 = vshll.u32 %v1353, 8
        %v1394 = vmul.u32.u64.compose %v1393, %v1392
        %v1395 = vextract.low.u32 %v1394
        %v1396 = vextract.high.u32 %v1394
        %v1397 = vmul.u32.u64.compose %v1393, %v1388
        %v1398 = vextract.low.u32 %v1397
        %v1399 = vextract.high.u32 %v1397
        %v1400 = vmul.u32 %v1393, %v1384
        %v1401 = vadd.s32 %v1396, %v1398
        %vm1402 = vc.u32 %v1396, %v1398
        %v1403 = vadd.s32 %v1399, 1
        %v1404 = vsel %vm1402, %v1403, %v1399
        %v1405 = vadd.s32 %v1400, %v1404
        %v1406 = vadd.s32 %v1405, 536870912
        %v1407 = vshrl.u32 %v1406, 30
        %v1408 = vshll.u32 %v1407, 30
        %v1409 = vsub.s32 %v1405, %v1408
        %vm1410 = vcmp.lt.s32.totalorder %v1409, 0
        %v1411 = vsub.s32 0, %v1409
        %v1412 = vsel %vm1410, %v1411, %v1409
        %v1413 = vclz %v1412
        %v1414 = vsub.s32 %v1413, 2
        %vm1415 = vcmp.gt.s32.totalorder 0, %v1414
        %v1416 = vsel %vm1415, 0, %v1414
        %v1417 = vsub.s32 32, %v1416
        %v1418 = vshll.u32 %v1409, %v1416
        %v1419 = vshrl.u32 %v1401, %v1417
        %v1420 = vor.u32 %v1418, %v1419
        %v1421 = vsub.s32 4294967266, %v1416
        %v1422 = vadd.s32 %v1421, 127
        %v1423 = vshll.u32 %v1422, 23
        %v1424 = vor.u32 4788187, %v1423
        %v1425 = vand.u32 2147483647, %v1424
        %v1427 = vcvt.s32.f32 %v1420
        %v1428 = vmul.f32 %v1427, %v1425
        %v1429 = vxor.u32 %v1428, 2147483648
        %v1430 = vsel %vm1347, %v1429, %v1428
        %v1431 = vsub.s32 4, %v1407
        %v1432 = vsel %vm1347, %v1431, %v1407
        %v1433 = vsel %vm1346, %v487, %v1430
        %v1434 = vsel %vm1346, 0, %v1432
        %v1435 = vcosq.f32.pop %v1433
        %v1436 = vsinq.f32.pop %v1433
        %vm1437 = vweird.f32 %v487
        %v1438 = vadd.s32 %v1434, 3
        %v1439 = vand.u32 %v1438, 3
        %vm1440 = vcmp.lt.s32.totalorder %v1439, 2
        %vm1441 = vcmp.eq.s32.totalorder %v1439, 0
        %v1442 = vxor.u32 %v1436, 2147483648
        %v1443 = vsel %vm1441, %v1435, %v1442
        %vm1444 = vcmp.eq.s32.totalorder %v1439, 2
        %v1445 = vxor.u32 %v1435, 2147483648
        %v1446 = vsel %vm1444, %v1445, %v1436
        %v1447 = vsel %vm1440, %v1443, %v1446
        %v1448 = vsel %vm1437, nan, %v1447
        %v1449 = vand.u32 2147483647, %v490
        %vm1450 = vcmp.le.f32.partialorder %v1449, 0.7853982
        %vm1451 = vcmp.lt.s32.totalorder %v490, 0
        %v1452 = vand.u32 %v490, 2139095040
        %v1453 = vshrl.u32 %v1452, 23
        %v1454 = vsub.s32 %v1453, 127
        %v1455 = vand.u32 2147483647, %v490
        %v1456 = vand.u32 %v1455, 8388607
        %v1457 = vor.u32 %v1456, 8388608
        %v1458 = vsub.s32 0, %v1457
        %v1459 = vadd.s32 %v1454, 1
        %vm1460 = vcmp.gt.s32.totalorder %v1459, 0
        %v1461 = vsel %vm1460, %v1459, 0
        %v1462 = vshrl.u32 %v1461, 5
        %v1463 = vand.u32 %v1461, 31
        %v1464 = vsub.s32 32, %v1463
        %v1465 = vshrl.u32 683565275, %v1464
        %v1466 = vshll.u32 683565275, %v1463
        %v1467 = vshrl.u32 2475754826, %v1464
        %v1468 = vor.u32 %v1466, %v1467
        %v1469 = vshll.u32 2475754826, %v1463
        %v1470 = vshrl.u32 2131351028, %v1464
        %v1471 = vor.u32 %v1469, %v1470
        %v1472 = vshll.u32 2131351028, %v1463
        %v1473 = vshrl.u32 2102212464, %v1464
        %v1474 = vor.u32 %v1472, %v1473
        %v1475 = vshll.u32 2102212464, %v1463
        %v1476 = vshrl.u32 920167782, %v1464
        %v1477 = vor.u32 %v1475, %v1476
        %v1478 = vshll.u32 920167782, %v1463
        %v1479 = vshrl.u32 1326507024, %v1464
        %v1480 = vor.u32 %v1478, %v1479
        %vm1481 = vcmp.lt.s32.totalorder %v1462, 1
        %vm1482 = vcmp.lt.s32.totalorder %v1462, 2
        %vm1483 = vcmp.lt.s32.totalorder %v1462, 3
        %vm1484 = vcmp.lt.s32.totalorder %v1462, 4
        %v1485 = vsel %vm1481, %v1465, %v1468
        %v1486 = vsel %vm1484, %v1474, 2102212464
        %v1487 = vsel %vm1483, %v1471, %v1486
        %v1488 = vsel %vm1482, %v1485, %v1487
        %v1489 = vsel %vm1481, %v1468, %v1471
        %v1490 = vsel %vm1484, %v1477, 920167782
        %v1491 = vsel %vm1483, %v1474, %v1490
        %v1492 = vsel %vm1482, %v1489, %v1491
        %v1493 = vsel %vm1481, %v1471, %v1474
        %v1494 = vsel %vm1484, %v1480, 1326507024
        %v1495 = vsel %vm1483, %v1477, %v1494
        %v1496 = vsel %vm1482, %v1493, %v1495
        %v1497 = vshll.u32 %v1457, 8
        %v1498 = vmul.u32.u64.compose %v1497, %v1496
        %v1499 = vextract.low.u32 %v1498
        %v1500 = vextract.high.u32 %v1498
        %v1501 = vmul.u32.u64.compose %v1497, %v1492
        %v1502 = vextract.low.u32 %v1501
        %v1503 = vextract.high.u32 %v1501
        %v1504 = vmul.u32 %v1497, %v1488
        %v1505 = vadd.s32 %v1500, %v1502
        %vm1506 = vc.u32 %v1500, %v1502
        %v1507 = vadd.s32 %v1503, 1
        %v1508 = vsel %vm1506, %v1507, %v1503
        %v1509 = vadd.s32 %v1504, %v1508
        %v1510 = vadd.s32 %v1509, 536870912
        %v1511 = vshrl.u32 %v1510, 30
        %v1512 = vshll.u32 %v1511, 30
        %v1513 = vsub.s32 %v1509, %v1512
        %vm1514 = vcmp.lt.s32.totalorder %v1513, 0
        %v1515 = vsub.s32 0, %v1513
        %v1516 = vsel %vm1514, %v1515, %v1513
        %v1517 = vclz %v1516
        %v1518 = vsub.s32 %v1517, 2
        %vm1519 = vcmp.gt.s32.totalorder 0, %v1518
        %v1520 = vsel %vm1519, 0, %v1518
        %v1521 = vsub.s32 32, %v1520
        %v1522 = vshll.u32 %v1513, %v1520
        %v1523 = vshrl.u32 %v1505, %v1521
        %v1524 = vor.u32 %v1522, %v1523
        %v1525 = vsub.s32 4294967266, %v1520
        %v1526 = vadd.s32 %v1525, 127
        %v1527 = vshll.u32 %v1526, 23
        %v1528 = vor.u32 4788187, %v1527
        %v1529 = vand.u32 2147483647, %v1528
        %v1531 = vcvt.s32.f32 %v1524
        %v1532 = vmul.f32 %v1531, %v1529
        %v1533 = vxor.u32 %v1532, 2147483648
        %v1534 = vsel %vm1451, %v1533, %v1532
        %v1535 = vsub.s32 4, %v1511
        %v1536 = vsel %vm1451, %v1535, %v1511
        %v1537 = vsel %vm1450, %v490, %v1534
        %v1538 = vsel %vm1450, 0, %v1536
        %v1539 = vcosq.f32.pop %v1537
        %v1540 = vsinq.f32.pop %v1537
        %vm1541 = vweird.f32 %v490
        %v1542 = vadd.s32 %v1538, 3
        %v1543 = vand.u32 %v1542, 3
        %vm1544 = vcmp.lt.s32.totalorder %v1543, 2
        %vm1545 = vcmp.eq.s32.totalorder %v1543, 0
        %v1546 = vxor.u32 %v1540, 2147483648
        %v1547 = vsel %vm1545, %v1539, %v1546
        %vm1548 = vcmp.eq.s32.totalorder %v1543, 2
        %v1549 = vxor.u32 %v1539, 2147483648
        %v1550 = vsel %vm1548, %v1549, %v1540
        %v1551 = vsel %vm1544, %v1547, %v1550
        %v1552 = vsel %vm1541, nan, %v1551
        %v1553 = vand.u32 2147483647, %v495
        %vm1554 = vcmp.le.f32.partialorder %v1553, 0.7853982
        %vm1555 = vcmp.lt.s32.totalorder %v495, 0
        %v1556 = vand.u32 %v495, 2139095040
        %v1557 = vshrl.u32 %v1556, 23
        %v1558 = vsub.s32 %v1557, 127
        %v1559 = vand.u32 2147483647, %v495
        %v1560 = vand.u32 %v1559, 8388607
        %v1561 = vor.u32 %v1560, 8388608
        %v1562 = vsub.s32 0, %v1561
        %v1563 = vadd.s32 %v1558, 1
        %vm1564 = vcmp.gt.s32.totalorder %v1563, 0
        %v1565 = vsel %vm1564, %v1563, 0
        %v1566 = vshrl.u32 %v1565, 5
        %v1567 = vand.u32 %v1565, 31
        %v1568 = vsub.s32 32, %v1567
        %v1569 = vshrl.u32 683565275, %v1568
        %v1570 = vshll.u32 683565275, %v1567
        %v1571 = vshrl.u32 2475754826, %v1568
        %v1572 = vor.u32 %v1570, %v1571
        %v1573 = vshll.u32 2475754826, %v1567
        %v1574 = vshrl.u32 2131351028, %v1568
        %v1575 = vor.u32 %v1573, %v1574
        %v1576 = vshll.u32 2131351028, %v1567
        %v1577 = vshrl.u32 2102212464, %v1568
        %v1578 = vor.u32 %v1576, %v1577
        %v1579 = vshll.u32 2102212464, %v1567
        %v1580 = vshrl.u32 920167782, %v1568
        %v1581 = vor.u32 %v1579, %v1580
        %v1582 = vshll.u32 920167782, %v1567
        %v1583 = vshrl.u32 1326507024, %v1568
        %v1584 = vor.u32 %v1582, %v1583
        %vm1585 = vcmp.lt.s32.totalorder %v1566, 1
        %vm1586 = vcmp.lt.s32.totalorder %v1566, 2
        %vm1587 = vcmp.lt.s32.totalorder %v1566, 3
        %vm1588 = vcmp.lt.s32.totalorder %v1566, 4
        %v1589 = vsel %vm1585, %v1569, %v1572
        %v1590 = vsel %vm1588, %v1578, 2102212464
        %v1591 = vsel %vm1587, %v1575, %v1590
        %v1592 = vsel %vm1586, %v1589, %v1591
        %v1593 = vsel %vm1585, %v1572, %v1575
        %v1594 = vsel %vm1588, %v1581, 920167782
        %v1595 = vsel %vm1587, %v1578, %v1594
        %v1596 = vsel %vm1586, %v1593, %v1595
        %v1597 = vsel %vm1585, %v1575, %v1578
        %v1598 = vsel %vm1588, %v1584, 1326507024
        %v1599 = vsel %vm1587, %v1581, %v1598
        %v1600 = vsel %vm1586, %v1597, %v1599
        %v1601 = vshll.u32 %v1561, 8
        %v1602 = vmul.u32.u64.compose %v1601, %v1600
        %v1603 = vextract.low.u32 %v1602
        %v1604 = vextract.high.u32 %v1602
        %v1605 = vmul.u32.u64.compose %v1601, %v1596
        %v1606 = vextract.low.u32 %v1605
        %v1607 = vextract.high.u32 %v1605
        %v1608 = vmul.u32 %v1601, %v1592
        %v1609 = vadd.s32 %v1604, %v1606
        %vm1610 = vc.u32 %v1604, %v1606
        %v1611 = vadd.s32 %v1607, 1
        %v1612 = vsel %vm1610, %v1611, %v1607
        %v1613 = vadd.s32 %v1608, %v1612
        %v1614 = vadd.s32 %v1613, 536870912
        %v1615 = vshrl.u32 %v1614, 30
        %v1616 = vshll.u32 %v1615, 30
        %v1617 = vsub.s32 %v1613, %v1616
        %vm1618 = vcmp.lt.s32.totalorder %v1617, 0
        %v1619 = vsub.s32 0, %v1617
        %v1620 = vsel %vm1618, %v1619, %v1617
        %v1621 = vclz %v1620
        %v1622 = vsub.s32 %v1621, 2
        %vm1623 = vcmp.gt.s32.totalorder 0, %v1622
        %v1624 = vsel %vm1623, 0, %v1622
        %v1625 = vsub.s32 32, %v1624
        %v1626 = vshll.u32 %v1617, %v1624
        %v1627 = vshrl.u32 %v1609, %v1625
        %v1628 = vor.u32 %v1626, %v1627
        %v1629 = vsub.s32 4294967266, %v1624
        %v1630 = vadd.s32 %v1629, 127
        %v1631 = vshll.u32 %v1630, 23
        %v1632 = vor.u32 4788187, %v1631
        %v1633 = vand.u32 2147483647, %v1632
        %v1635 = vcvt.s32.f32 %v1628
        %v1636 = vmul.f32 %v1635, %v1633
        %v1637 = vxor.u32 %v1636, 2147483648
        %v1638 = vsel %vm1555, %v1637, %v1636
        %v1639 = vsub.s32 4, %v1615
        %v1640 = vsel %vm1555, %v1639, %v1615
        %v1641 = vsel %vm1554, %v495, %v1638
        %v1642 = vsel %vm1554, 0, %v1640
        %v1643 = vcosq.f32.pop %v1641
        %v1644 = vsinq.f32.pop %v1641
        %vm1645 = vweird.f32 %v495
        %v1646 = vadd.s32 %v1642, 3
        %v1647 = vand.u32 %v1646, 3
        %vm1648 = vcmp.lt.s32.totalorder %v1647, 2
        %vm1649 = vcmp.eq.s32.totalorder %v1647, 0
        %v1650 = vxor.u32 %v1644, 2147483648
        %v1651 = vsel %vm1649, %v1643, %v1650
        %vm1652 = vcmp.eq.s32.totalorder %v1647, 2
        %v1653 = vxor.u32 %v1643, 2147483648
        %v1654 = vsel %vm1652, %v1653, %v1644
        %v1655 = vsel %vm1648, %v1651, %v1654
        %v1656 = vsel %vm1645, nan, %v1655
        %v1657 = vand.u32 2147483647, %v498
        %vm1658 = vcmp.le.f32.partialorder %v1657, 0.7853982
        %vm1659 = vcmp.lt.s32.totalorder %v498, 0
        %v1660 = vand.u32 %v498, 2139095040
        %v1661 = vshrl.u32 %v1660, 23
        %v1662 = vsub.s32 %v1661, 127
        %v1663 = vand.u32 2147483647, %v498
        %v1664 = vand.u32 %v1663, 8388607
        %v1665 = vor.u32 %v1664, 8388608
        %v1666 = vsub.s32 0, %v1665
        %v1667 = vadd.s32 %v1662, 1
        %vm1668 = vcmp.gt.s32.totalorder %v1667, 0
        %v1669 = vsel %vm1668, %v1667, 0
        %v1670 = vshrl.u32 %v1669, 5
        %v1671 = vand.u32 %v1669, 31
        %v1672 = vsub.s32 32, %v1671
        %v1673 = vshrl.u32 683565275, %v1672
        %v1674 = vshll.u32 683565275, %v1671
        %v1675 = vshrl.u32 2475754826, %v1672
        %v1676 = vor.u32 %v1674, %v1675
        %v1677 = vshll.u32 2475754826, %v1671
        %v1678 = vshrl.u32 2131351028, %v1672
        %v1679 = vor.u32 %v1677, %v1678
        %v1680 = vshll.u32 2131351028, %v1671
        %v1681 = vshrl.u32 2102212464, %v1672
        %v1682 = vor.u32 %v1680, %v1681
        %v1683 = vshll.u32 2102212464, %v1671
        %v1684 = vshrl.u32 920167782, %v1672
        %v1685 = vor.u32 %v1683, %v1684
        %v1686 = vshll.u32 920167782, %v1671
        %v1687 = vshrl.u32 1326507024, %v1672
        %v1688 = vor.u32 %v1686, %v1687
        %vm1689 = vcmp.lt.s32.totalorder %v1670, 1
        %vm1690 = vcmp.lt.s32.totalorder %v1670, 2
        %vm1691 = vcmp.lt.s32.totalorder %v1670, 3
        %vm1692 = vcmp.lt.s32.totalorder %v1670, 4
        %v1693 = vsel %vm1689, %v1673, %v1676
        %v1694 = vsel %vm1692, %v1682, 2102212464
        %v1695 = vsel %vm1691, %v1679, %v1694
        %v1696 = vsel %vm1690, %v1693, %v1695
        %v1697 = vsel %vm1689, %v1676, %v1679
        %v1698 = vsel %vm1692, %v1685, 920167782
        %v1699 = vsel %vm1691, %v1682, %v1698
        %v1700 = vsel %vm1690, %v1697, %v1699
        %v1701 = vsel %vm1689, %v1679, %v1682
        %v1702 = vsel %vm1692, %v1688, 1326507024
        %v1703 = vsel %vm1691, %v1685, %v1702
        %v1704 = vsel %vm1690, %v1701, %v1703
        %v1705 = vshll.u32 %v1665, 8
        %v1706 = vmul.u32.u64.compose %v1705, %v1704
        %v1707 = vextract.low.u32 %v1706
        %v1708 = vextract.high.u32 %v1706
        %v1709 = vmul.u32.u64.compose %v1705, %v1700
        %v1710 = vextract.low.u32 %v1709
        %v1711 = vextract.high.u32 %v1709
        %v1712 = vmul.u32 %v1705, %v1696
        %v1713 = vadd.s32 %v1708, %v1710
        %vm1714 = vc.u32 %v1708, %v1710
        %v1715 = vadd.s32 %v1711, 1
        %v1716 = vsel %vm1714, %v1715, %v1711
        %v1717 = vadd.s32 %v1712, %v1716
        %v1718 = vadd.s32 %v1717, 536870912
        %v1719 = vshrl.u32 %v1718, 30
        %v1720 = vshll.u32 %v1719, 30
        %v1721 = vsub.s32 %v1717, %v1720
        %vm1722 = vcmp.lt.s32.totalorder %v1721, 0
        %v1723 = vsub.s32 0, %v1721
        %v1724 = vsel %vm1722, %v1723, %v1721
        %v1725 = vclz %v1724
        %v1726 = vsub.s32 %v1725, 2
        %vm1727 = vcmp.gt.s32.totalorder 0, %v1726
        %v1728 = vsel %vm1727, 0, %v1726
        %v1729 = vsub.s32 32, %v1728
        %v1730 = vshll.u32 %v1721, %v1728
        %v1731 = vshrl.u32 %v1713, %v1729
        %v1732 = vor.u32 %v1730, %v1731
        %v1733 = vsub.s32 4294967266, %v1728
        %v1734 = vadd.s32 %v1733, 127
        %v1735 = vshll.u32 %v1734, 23
        %v1736 = vor.u32 4788187, %v1735
        %v1737 = vand.u32 2147483647, %v1736
        %v1739 = vcvt.s32.f32 %v1732
        %v1740 = vmul.f32 %v1739, %v1737
        %v1741 = vxor.u32 %v1740, 2147483648
        %v1742 = vsel %vm1659, %v1741, %v1740
        %v1743 = vsub.s32 4, %v1719
        %v1744 = vsel %vm1659, %v1743, %v1719
        %v1745 = vsel %vm1658, %v498, %v1742
        %v1746 = vsel %vm1658, 0, %v1744
        %v1747 = vcosq.f32.pop %v1745
        %v1748 = vsinq.f32.pop %v1745
        %vm1749 = vweird.f32 %v498
        %v1750 = vadd.s32 %v1746, 3
        %v1751 = vand.u32 %v1750, 3
        %vm1752 = vcmp.lt.s32.totalorder %v1751, 2
        %vm1753 = vcmp.eq.s32.totalorder %v1751, 0
        %v1754 = vxor.u32 %v1748, 2147483648
        %v1755 = vsel %vm1753, %v1747, %v1754
        %vm1756 = vcmp.eq.s32.totalorder %v1751, 2
        %v1757 = vxor.u32 %v1747, 2147483648
        %v1758 = vsel %vm1756, %v1757, %v1748
        %v1759 = vsel %vm1752, %v1755, %v1758
        %v1760 = vsel %vm1749, nan, %v1759
        %v1761 = vmul.f32 %v502, %v1240
        %v1762 = vmul.f32 %v504, %v1344
        %v1763 = vmul.f32 %v506, %v1448
        %v1764 = vmul.f32 %v508, %v1552
        %v1765 = vmul.f32 %v510, %v1656
        %v1766 = vmul.f32 %v512, %v1760
        %v1767 = vmul.f32 %v1131, %v407
        %v1768 = vmul.f32 %v1132, %v410
        %v1769 = vmul.f32 %v1133, %v415
        %v1770 = vmul.f32 %v1134, %v418
        %v1771 = vmul.f32 %v1135, %v423
        %v1772 = vmul.f32 %v1136, %v426
        %v1773 = vmul.f32 %v1761, %v431
        %v1774 = vmul.f32 %v1762, %v434
        %v1775 = vmul.f32 %v1763, %v439
        %v1776 = vmul.f32 %v1764, %v442
        %v1777 = vmul.f32 %v1765, %v447
        %v1778 = vmul.f32 %v1766, %v450
        %v1779 = vsub.f32 %v1767, %v1773
        %v1780 = vsub.f32 %v1768, %v1774
        %v1781 = vsub.f32 %v1769, %v1775
        %v1782 = vsub.f32 %v1770, %v1776
        %v1783 = vsub.f32 %v1771, %v1777
        %v1784 = vsub.f32 %v1772, %v1778
        %v1785 = vpack.c.bf16 %v1780, %v1779
        %v1786 = vpack.c.bf16 %v1782, %v1781
        %v1787 = vpack.c.bf16 %v1784, %v1783
        %1788 = vst [vmem:[#allocation2] sm:$0xff] %v1785
        %1789 = vst [vmem:[#allocation2 + $0x8] sm:$0xff] %v1786
        %1790 = vst [vmem:[#allocation2 + $0x10] sm:$0xff] %v1787
        %v1791 = vmul.f32 %v1131, %v431
        %v1792 = vmul.f32 %v1132, %v434
        %v1793 = vmul.f32 %v1133, %v439
        %v1794 = vmul.f32 %v1134, %v442
        %v1795 = vmul.f32 %v1135, %v447
        %v1796 = vmul.f32 %v1136, %v450
        %v1797 = vmul.f32 %v1761, %v407
        %v1798 = vmul.f32 %v1762, %v410
        %v1799 = vmul.f32 %v1763, %v415
        %v1800 = vmul.f32 %v1764, %v418
        %v1801 = vmul.f32 %v1765, %v423
        %v1802 = vmul.f32 %v1766, %v426
        %v1803 = vadd.f32 %v1791, %v1797
        %v1804 = vadd.f32 %v1792, %v1798
        %v1805 = vadd.f32 %v1793, %v1799
        %v1806 = vadd.f32 %v1794, %v1800
        %v1807 = vadd.f32 %v1795, %v1801
        %v1808 = vadd.f32 %v1796, %v1802
        %v1809 = vpack.c.bf16 %v1804, %v1803
        %v1810 = vpack.c.bf16 %v1806, %v1805
        %v1811 = vpack.c.bf16 %v1808, %v1807
        %1812 = vst [vmem:[#allocation2 + $0x18] sm:$0xff] %v1809
        %1813 = vst [vmem:[#allocation2 + $0x20] sm:$0xff] %v1810
        %1814 = vst [vmem:[#allocation2 + $0x28] sm:$0xff] %v1811
        %v1815 = vld [vmem:[%s2] sm:$0xf]
        %v1816 = vld [vmem:[%s2 + $0x4] sm:$0xf]
        %v1817 = vld [vmem:[%s2 + $0x8] sm:$0xf]
        %v1818 = vld [vmem:[%s2 + $0xc] sm:$0xf]
        %v1819 = vld [vmem:[#allocation2] sm:$0xff]
        %v1820 = vld [vmem:[#allocation2 + $0x8] sm:$0xff]
        %v1821 = vld [vmem:[#allocation2 + $0x10] sm:$0xff]
        %v1822 = vld [vmem:[#allocation2 + $0x18] sm:$0xff]
        %v1823 = vld [vmem:[#allocation2 + $0x20] sm:$0xff]
        %v1824 = vld [vmem:[#allocation2 + $0x28] sm:$0xff]
        %v1829 = vunpack.c.l.b16 %v1815
        %v1830 = vunpack.c.l.b16 %v1816
        %v1831 = vunpack.c.l.b16 %v1817
        %v1832 = vunpack.c.l.b16 %v1818
        %v1833 = vpack.c.b16 %v1830, %v1829
        %v1834 = vpack.c.b16 %v1832, %v1831
        %vm1835 = vcmask 785408
        %v1837 = vsel %vm1835, %v1833, 0
        %v1840 = vsel %vm1835, %v1834, 0
        %1842 = vmatprep.subr.bf16.mxu0 0
        %1843 = vmatpush1.bf16.msra.mxu0 %v1819
        %1844 = vmatprep.subr.bf16.mxu0 0
        %1845 = vmatpush1.bf16.msra.mxu0 %v1820
        %1846 = vmatprep.subr.bf16.mxu0 0
        %1847 = vmatpush1.bf16.msra.mxu0 %v1821
        %1848 = vmatprep.subr.bf16.mxu0 0
        %1849 = vmatpush1.bf16.msra.mxu0 %v1822
        %1850 = vmatprep.subr.bf16.mxu0 0
        %1851 = vmatpush1.bf16.msra.mxu0 %v1823
        %1852 = vmatprep.subr.bf16.mxu0 0
        %1853 = vmatpush1.bf16.msra.mxu0 %v1824
        %1854 = vmatprep.subr.bf16.mxu0 0
        %1855 = vmatpush1.bf16.msra.mxu0 0
        %1856 = vmatprep.subr.bf16.mxu0 0
        %1857 = vmatpush1.bf16.msra.mxu0 0
        %1858 = vmatprep.subr.bf16.mxu0 0
        %1859 = vmatpush1.bf16.msra.mxu0 0
        %1860 = vmatprep.subr.bf16.mxu0 0
        %1861 = vmatpush1.bf16.msra.mxu0 0
        %1862 = vmatprep.subr.bf16.mxu0 0
        %1863 = vmatpush1.bf16.msra.mxu0 0
        %1864 = vmatprep.subr.bf16.mxu0 0
        %1865 = vmatpush1.bf16.msra.mxu0 0
        %1866 = vmatprep.subr.bf16.mxu0 0
        %1867 = vmatpush1.bf16.msra.mxu0 0
        %1868 = vmatprep.subr.bf16.mxu0 0
        %1869 = vmatpush1.bf16.msra.mxu0 0
        %1870 = vmatprep.subr.bf16.mxu0 0
        %1871 = vmatpush1.bf16.msra.mxu0 0
        %1872 = vmatprep.subr.bf16.mxu0 0
        %1873 = vmatpush1.bf16.msra.mxu0 0
        %1874 = vmatprep.mubr.bf16.mxu0 0
        %1875 = vmatmul.mubr.bf16.gmra.mrb[0].mxu0 %v1837
        %v1876 = vpop.f32.mrb[0].mxu0
        %v1877 = vadd.f32 0.0, %v1876
        %v1878 = vpop.f32.mrb[0].mxu0
        %v1879 = vpop.f32.mrb[0].mxu0
        %v1880 = vadd.f32 0.0, %v1879
        %v1881 = vpop.f32.mrb[0].mxu0
        %1882 = vmatprep.mubr.bf16.mxu0 0
        %1883 = vmatmul.mubr.bf16.gmra.mrb[0].mxu0 %v1840
        %v1884 = vpop.f32.mrb[0].mxu0
        %v1885 = vadd.f32 0.0, %v1884
        %v1886 = vpop.f32.mrb[0].mxu0
        %v1887 = vpop.f32.mrb[0].mxu0
        %v1888 = vadd.f32 0.0, %v1887
        %v1889 = vpop.f32.mrb[0].mxu0
        %1890 = vdwg.mxu0
        %1891 = vst [vmem:[%s225] sm:$0xff] %v1877
        %1892 = vst [vmem:[%s225 + $0x8] sm:$0xff] %v1880
        %1893 = vst [vmem:[%s225 + $0x10] sm:$0xff] %v1885
        %1894 = vst [vmem:[%s225 + $0x18] sm:$0xff] %v1888
        %s1895 = sand.u32 %s90, 1
        %s1896 = sand.u32 %s90, 1
        %s1897 = smul.addr %s1896, 32
        %s1898 = scalar_lea.vmem [#allocation4], %s1897
        // Predicated region
        $region74: #{frequency_domain_fir_filter.1} parent=68 // pred_check
          %p1899 = pneg %p100
        $region75: #{frequency_domain_fir_filter.1} parent=68 // pred_check_branch
          %1901 = sbr.rel (%p1899) target = $region77
        $region76: #{frequency_domain_fir_filter.1} parent=68 // pred_region
          %s1902 = smul.addr %s14, 8
          %s1903 = scalar_lea.vmem %s3, %s1902
          // Predicated region
          $region78: #{frequency_domain_fir_filter.1} parent=76 // pred_check
            _
          $region79: #{frequency_domain_fir_filter.1} parent=76 // pred_check_branch
            %1905 = sbr.rel (0) target = $region81
          $region80: #{frequency_domain_fir_filter.1} parent=76 // pred_region
            // Predicated region
            $region82: #{frequency_domain_fir_filter.1} parent=80 // pred_check
              _
            $region83: #{frequency_domain_fir_filter.1} parent=80 // pred_check_branch
              %1907 = sbr.rel (0) target = $region85
            $region84: #{frequency_domain_fir_filter.1} parent=80 // pred_region
              // Predicated region
              $region97: #{frequency_domain_fir_filter.1} parent=84 // pred_check
                _
              $region98: #{frequency_domain_fir_filter.1} parent=84 // pred_check_branch
                %1928 = sbr.rel (0) target = $region100
              $region99: #{frequency_domain_fir_filter.1} parent=84 // pred_region
                loop: start=0, step=1, limit=1
                $region101: #{frequency_domain_fir_filter.1} parent=99 // loop_pre_header
                  _
                $region102: #{frequency_domain_fir_filter.1} parent=99 // loop_header
                  %s1930 = sphi 0, %s1934
                  %p1931 = scmp.ge.s32.totalorder %s1930, 1
                  %s1935 = sphi %s1898, %s1898
                  %s1936 = sphi %s1903, %s1903
                $region103: #{frequency_domain_fir_filter.1} parent=99 // loop_header_branch
                  %1933 = sbr.rel (%p1931) target = $region107
                $region104: #{frequency_domain_fir_filter.1} parent=99 // loop_body
                  %v1937 = vld [vmem:[%s1935] sm:$0xff]
                  %1938 = vst [vmem:[%s1936] sm:$0xff] %v1937
                  %v1939 = vld [vmem:[%s1935 + $0x8] sm:$0xff]
                  %1940 = vst [vmem:[%s1936 + $0x10] sm:$0xff] %v1939
                  %v1941 = vld [vmem:[%s1935 + $0x10] sm:$0xff]
                  %1942 = vst [vmem:[%s1936 + $0x20] sm:$0xff] %v1941
                  %v1943 = vld [vmem:[%s1935 + $0x18] sm:$0xff]
                  %1944 = vst [vmem:[%s1936 + $0x30] sm:$0xff] %v1943
                $region105: #{frequency_domain_fir_filter.1} parent=99 // loop_footer
                  %s1934 = sadd.s32 1, %s1930
                $region106: #{frequency_domain_fir_filter.1} parent=99 // loop_footer_branch
                  %1929 = sbr.rel target = $region102
                $region107: #{frequency_domain_fir_filter.1} parent=99 // loop_exit
                  _
              $region100: #{frequency_domain_fir_filter.1} parent=84 // pred_fallthru
                _
              // Predicated region
              $region108: #{frequency_domain_fir_filter.1} parent=84 // pred_check
                _
              $region109: #{frequency_domain_fir_filter.1} parent=84 // pred_check_branch
                %1946 = sbr.rel target = $region111
              $region110: #{frequency_domain_fir_filter.1} parent=84 // pred_region
                _
              $region111: #{frequency_domain_fir_filter.1} parent=84 // pred_fallthru
                _
            $region85: #{frequency_domain_fir_filter.1} parent=80 // pred_fallthru
              _
            // Predicated region
            $region86: #{frequency_domain_fir_filter.1} parent=80 // pred_check
              _
            $region87: #{frequency_domain_fir_filter.1} parent=80 // pred_check_branch
              %1909 = sbr.rel target = $region89
            $region88: #{frequency_domain_fir_filter.1} parent=80 // pred_region
              loop: start=0, step=1, limit=1
              $region90: #{frequency_domain_fir_filter.1} parent=88 // loop_pre_header
                _
              $region91: #{frequency_domain_fir_filter.1} parent=88 // loop_header
                %s1912 = sphi 0, %s1916
                %p1913 = scmp.ge.s32.totalorder %s1912, 1
                %s1917 = sphi %s1898, %s1898
                %s1918 = sphi %s1903, %s1903
              $region92: #{frequency_domain_fir_filter.1} parent=88 // loop_header_branch
                %1915 = sbr.rel (%p1913) target = $region96
              $region93: #{frequency_domain_fir_filter.1} parent=88 // loop_body
                %v1919 = vld [vmem:[%s1917] sm:$0xff]
                %1920 = vst [vmem:[%s1918] sm:$0xff] %v1919
                %v1921 = vld [vmem:[%s1917 + $0x8] sm:$0xff]
                %1922 = vst [vmem:[%s1918 + $0x10] sm:$0xff] %v1921
                %v1923 = vld [vmem:[%s1917 + $0x10] sm:$0xff]
                %1924 = vst [vmem:[%s1918 + $0x20] sm:$0xff] %v1923
                %v1925 = vld [vmem:[%s1917 + $0x18] sm:$0xff]
                %1926 = vst [vmem:[%s1918 + $0x30] sm:$0xff] %v1925
              $region94: #{frequency_domain_fir_filter.1} parent=88 // loop_footer
                %s1916 = sadd.s32 1, %s1912
              $region95: #{frequency_domain_fir_filter.1} parent=88 // loop_footer_branch
                %1911 = sbr.rel target = $region91
              $region96: #{frequency_domain_fir_filter.1} parent=88 // loop_exit
                _
            $region89: #{frequency_domain_fir_filter.1} parent=80 // pred_fallthru
              _
          $region81: #{frequency_domain_fir_filter.1} parent=76 // pred_fallthru
            _
          %1947 = vnop
        $region77: #{frequency_domain_fir_filter.1} parent=68 // pred_fallthru
          _
      $region69: #{frequency_domain_fir_filter.1} parent=5 // pred_fallthru
        _
      %p1948 = scmp.le.s32.totalorder 2, %s9
      // Predicated region
      $region112: #{frequency_domain_fir_filter.1} parent=5 // pred_check
        %p1949 = pneg %p1948
      $region113: #{frequency_domain_fir_filter.1} parent=5 // pred_check_branch
        %1951 = sbr.rel (%p1949) target = $region115
      $region114: #{frequency_domain_fir_filter.1} parent=5 // pred_region
        %s1952 = ssub.s32 %s9, 2
        // Predicated region
        $region116: #{frequency_domain_fir_filter.1} parent=114 // pred_check
          %p1953 = pneg %p106
        $region117: #{frequency_domain_fir_filter.1} parent=114 // pred_check_branch
          %1955 = sbr.rel (%p1953) target = $region119
        $region118: #{frequency_domain_fir_filter.1} parent=114 // pred_region
          %s1956 = sand.u32 %s91, 1
          %s1957 = sand.u32 %s91, 1
          %s1958 = smul.addr %s1957, 32
          %s1959 = scalar_lea.vmem [#allocation4], %s1958
        $region119: #{frequency_domain_fir_filter.1} parent=114 // pred_fallthru
          _
      $region115: #{frequency_domain_fir_filter.1} parent=5 // pred_fallthru
        _
    $region6: #{frequency_domain_fir_filter.1} parent=1 // loop_footer
      %s13 = sadd.s32 1, %s9
    $region7: #{frequency_domain_fir_filter.1} parent=1 // loop_footer_branch
      %8 = sbr.rel target = $region3
    $region8: #{frequency_domain_fir_filter.1} parent=1 // loop_exit
      _

</llo_original>
